<compile_context>
chip_gen: v7x
topology: tpu7x:2x2x1
jax: 0.10.0
libtpu: 0.0.40
codegen_flags: <defaults>
</compile_context>

<pallas_src>
import numpy as np
import jax
import jax.numpy as jnp
from jax import lax
from jax.experimental import pallas as pl
from jax.experimental.pallas import tpu as pltpu


# ----------------------------- Pallas kernel --------------------------------
def depprobe_mix_kernel(warc_ref, wlbl_ref, layer_ref, mask_ref, w_ref,
                        dep_ref, dist_ref, logits_ref, acc_arc, acc_lbl):
    # warc_ref / wlbl_ref : (L,) f32 in SMEM (softmaxed mixing weights)
    # layer_ref           : (Bt, Tp, E)     -- Bt sentences of one LM layer
    # mask_ref            : (Bt, Tp, 1) f32 -- additive 0 / -inf attention mask
    # w_ref               : (E, Dp+Rp) bf16 -- [w_arc | w_lbl], zero-padded lanes
    # acc_arc / acc_lbl   : (Bt*Tp, Dp) / (Bt*Tp, Rp) f32 VMEM accumulators
    l = pl.program_id(1)
    n_layers = pl.num_programs(1)
    Bt, Tp, E = layer_ref.shape
    Dp = dep_ref.shape[-1]
    Rp = logits_ref.shape[-1]

    @pl.when(l == 0)
    def _init():
        acc_arc[...] = jnp.zeros_like(acc_arc)
        acc_lbl[...] = jnp.zeros_like(acc_lbl)

    # --- project-then-mix: one 256-wide bf16 MXU matmul per layer, f32 acc ---
    lay = layer_ref[...].reshape(Bt * Tp, E).astype(jnp.bfloat16)
    proj = jnp.dot(lay, w_ref[...], preferred_element_type=jnp.float32)  # (Bt*Tp, Dp+Rp)
    acc_arc[...] += warc_ref[l] * proj[:, :Dp]    # SMEM scalar splat, lane-aligned halves
    acc_lbl[...] += wlbl_ref[l] * proj[:, Dp:]

    @pl.when(l == n_layers - 1)
    def _epilogue():
        dep = acc_arc[...]                                        # (Bt*Tp, Dp) f32
        dep_ref[...] = dep.reshape(Bt, Tp, Dp).astype(dep_ref.dtype)

        lbl = acc_lbl[...].reshape(Bt, Tp, Rp)
        logits_ref[...] = (lbl + mask_ref[...]).astype(logits_ref.dtype)

        # pairwise ||d_i - d_j||^2 = ||d_i||^2 + ||d_j||^2 - 2<d_i, d_j>
        # (gram kept in f32 -- the epilogue runs on 1 of L steps so the slower
        #  f32 MXU passes are hidden; f32 also limits cancellation error).
        dims = (((1,), (1,)), ((), ()))
        ones_row = jnp.ones((1, Dp), jnp.float32)                 # hoisted out of the loop
        for s in range(Bt):                                       # static unroll, Bt small
            d = dep[s * Tp:(s + 1) * Tp, :]                       # (Tp, Dp), tile-aligned slice
            sq = d * d
            gram = lax.dot_general(d, d, dims,
                                   preferred_element_type=jnp.float32)       # (Tp, Tp)
            norms_col = jnp.sum(sq, axis=-1, keepdims=True)                  # (Tp, 1) VPU reduce
            # row of norms via a tiny M=1 MXU dot (robust lowering; the
            # degenerate (Tp,1)->(1,Tp) XLU transpose is the alternative).
            norms_row = lax.dot_general(ones_row, sq, dims,
                                        preferred_element_type=jnp.float32)  # (1, Tp)
            dist_ref[s] = jnp.maximum(norms_col + norms_row - 2.0 * gram, 0.0)


# ------------------------------- wrapper -------------------------------------
def _round_up(x, m):
    return ((x + m - 1) // m) * m


def depprobe_mix_pallas(emb_layers, att_sentences, params):
    """emb_layers: (L, B, T, E) float; att_sentences: (B, T) bool."""
    L, B, T, E = emb_layers.shape
    D = params["w_arc"].shape[0]              # nn.Linear(E, D, bias=False).weight: (D, E)
    R = params["w_lbl"].shape[0]
    Dp = _round_up(D, 128)                    # lane-dense padded output widths
    Rp = _round_up(R, 128)
    Tp = _round_up(T, 128)                    # lane-dense (T, T) distance output

    in_itemsize = emb_layers.dtype.itemsize

    # --- choose sentences-per-step Bt: ~2 MiB contiguous DMA blocks, >= 2
    # --- batch blocks for TensorCore sharding, <= 24 MiB VMEM working set.
    def vmem_est(bt):
        layer = bt * Tp * E * in_itemsize                       # double-buffered input
        outs = bt * Tp * (Dp * 2 + Tp * 4 + Rp * 2)             # double-buffered outputs
        acc = bt * Tp * (Dp + Rp) * 4
        return 2 * layer + 2 * outs + acc + E * (Dp + Rp) * 2

    Bt = max(1, min(B, (2 << 20) // max(1, Tp * E * in_itemsize)))
    while Bt > 1 and pl.cdiv(B, Bt) < 2:
        Bt -= 1
    while Bt > 1 and vmem_est(Bt) > (24 << 20):
        Bt -= 1
    Bp = _round_up(B, Bt)

    # pad to (L, Bp, Tp, E) / (Bp, Tp); NO wrapper-side dtype cast (extra HBM pass)
    if Bp > B or Tp > T:
        emb_layers = jnp.pad(emb_layers, ((0, 0), (0, Bp - B), (0, Tp - T), (0, 0)))
        att_p = jnp.pad(att_sentences, ((0, Bp - B), (0, Tp - T)))
    else:
        att_p = att_sentences

    warc = jax.nn.softmax(params["mix_arc"].astype(jnp.float32), axis=0)   # (L,)
    wlbl = jax.nn.softmax(params["mix_lbl"].astype(jnp.float32), axis=0)   # (L,)

    # concatenated (E, Dp+Rp) bf16 weight: one 256-wide MXU push per layer
    w_cat = jnp.zeros((E, Dp + Rp), jnp.bfloat16)
    w_cat = w_cat.at[:, :D].set(params["w_arc"].T.astype(jnp.bfloat16))
    w_cat = w_cat.at[:, Dp:Dp + R].set(params["w_lbl"].T.astype(jnp.bfloat16))

    mask_add = jnp.where(att_p, 0.0, -jnp.inf).astype(jnp.float32)[:, :, None]  # (Bp, Tp, 1)

    out_shape = (
        jax.ShapeDtypeStruct((Bp, Tp, Dp), jnp.bfloat16),   # dependency embeddings (padded)
        jax.ShapeDtypeStruct((Bp, Tp, Tp), jnp.float32),    # distances (f32 for argmin decode)
        jax.ShapeDtypeStruct((Bp, Tp, Rp), jnp.bfloat16),   # label logits (padded)
    )
    dep_p, dist_p, logits_p = pl.pallas_call(
        depprobe_mix_kernel,
        out_shape=out_shape,
        grid=(Bp // Bt, L),
        in_specs=[
            pl.BlockSpec(memory_space=pltpu.MemorySpace.SMEM),             # softmax(mix_arc)
            pl.BlockSpec(memory_space=pltpu.MemorySpace.SMEM),             # softmax(mix_lbl)
            # TODO(synk): if a profile shows an exposed DMA bubble around the
            # last-l (epilogue) step, add pipeline_mode=pl.Buffered(3) here.
            pl.BlockSpec((None, Bt, Tp, E), lambda bb, l: (l, bb, 0, 0)),  # Bt sentences, one layer
            pl.BlockSpec((Bt, Tp, 1), lambda bb, l: (bb, 0, 0)),           # additive attention mask
            pl.BlockSpec((E, Dp + Rp), lambda bb, l: (0, 0)),              # concatenated weights
        ],
        out_specs=[
            pl.BlockSpec((Bt, Tp, Dp), lambda bb, l: (bb, 0, 0)),
            pl.BlockSpec((Bt, Tp, Tp), lambda bb, l: (bb, 0, 0)),
            pl.BlockSpec((Bt, Tp, Rp), lambda bb, l: (bb, 0, 0)),
        ],
        scratch_shapes=[
            pltpu.VMEM((Bt * Tp, Dp), jnp.float32),   # mixed arc-projection accumulator
            pltpu.VMEM((Bt * Tp, Rp), jnp.float32),   # mixed lbl-projection accumulator
        ],
        compiler_params=pltpu.CompilerParams(
            # TODO(synk): on v7x verify both TensorCores pick up the batch axis;
            # if not, switch that axis to pltpu.CORE_PARALLEL.
            dimension_semantics=("parallel", "arbitrary"),
            vmem_limit_bytes=40 * 1024 * 1024),
    )(warc, wlbl, emb_layers, mask_add, w_cat)

    return dep_p[:B, :T, :D], dist_p[:B, :T, :T], logits_p[:B, :T, :R]


# ------------------------- decode glue (outside kernel) ---------------------
def get_labels(lbl_logits, root_label):
    """Mirrors LabelClassifier.get_labels."""
    B = lbl_logits.shape[0]
    probs = jax.nn.softmax(lbl_logits.astype(jnp.float32), axis=-1)
    probs = jnp.nan_to_num(probs, nan=-jnp.inf)
    roots = jnp.argmax(probs[:, :, root_label], axis=-1)
    noroot = probs.at[:, :, root_label].set(-jnp.inf)
    labels = jnp.argmax(noroot, axis=-1)
    labels = labels.at[jnp.arange(B), roots].set(root_label)
    labels = jnp.where(probs[:, :, 0] == -jnp.inf, -1, labels)
    return roots, labels


def to_graph(roots, distances, mask):
    """Mirrors RootedGraphPredictor.to_graph (sequential greedy attach, host side)."""
    # TODO(synk): data-dependent Python-list greedy MST decode has no clean
    # Pallas equivalent; executed on host exactly as the PyTorch reference does.
    roots = np.asarray(roots)
    distances = np.asarray(distances)
    mask = np.asarray(mask)
    graphs = np.full(mask.shape, -2, dtype=np.int64)
    for sidx in range(graphs.shape[0]):
        sen_len = int(mask[sidx].sum())
        sen_root = int(roots[sidx])
        graphs[sidx, sen_root] = -1
        tree_nodes = [sen_root]
        free_nodes = [n for n in range(sen_len) if n != sen_root]
        while free_nodes:
            cur = distances[sidx][np.asarray(tree_nodes)][:, np.asarray(free_nodes)]
            min_idx = int(np.argmin(cur))
            min_tree = tree_nodes[min_idx // len(free_nodes)]
            min_free = free_nodes[min_idx % len(free_nodes)]
            graphs[sidx, min_free] = min_tree
            tree_nodes.append(min_free)
            free_nodes.remove(min_free)
    return graphs


def depprobe_mix_forward(emb_layers, att_sentences, params, root_label, decode=True):
    dep, dist, logits = depprobe_mix_pallas(emb_layers, att_sentences, params)
    results = {"dependency_embeddings": dep, "distances": dist, "label_logits": logits}
    if decode:
        roots, labels = get_labels(logits, root_label)
        graphs = to_graph(roots, dist, att_sentences)
        results["graphs"] = graphs
        results["labels"] = labels
    return results


# ------------------------------ references ----------------------------------
def reference_matched(emb_layers, att_mask, params):
    """Pure-JAX reference with the SAME precision choices as the kernel
    (bf16 layer + bf16 weights into the MXU, f32 scale-accumulate, bf16 outputs)."""
    L = emb_layers.shape[0]
    warc = jax.nn.softmax(params["mix_arc"].astype(jnp.float32), axis=0)
    wlbl = jax.nn.softmax(params["mix_lbl"].astype(jnp.float32), axis=0)
    wA = params["w_arc"].T.astype(jnp.bfloat16)
    wL = params["w_lbl"].T.astype(jnp.bfloat16)
    dep = jnp.zeros(emb_layers.shape[1:3] + (wA.shape[1],), jnp.float32)
    lbl = jnp.zeros(emb_layers.shape[1:3] + (wL.shape[1],), jnp.float32)
    for l in range(L):
        lay = emb_layers[l].astype(jnp.bfloat16)
        dep = dep + warc[l] * jnp.dot(lay, wA, preferred_element_type=jnp.float32)
        lbl = lbl + wlbl[l] * jnp.dot(lay, wL, preferred_element_type=jnp.float32)
    diff = dep[:, :, None, :] - dep[:, None, :, :]
    dist = jnp.sum(diff * diff, axis=-1)
    logits = jnp.where(att_mask[..., None], lbl, -jnp.inf)
    return dep.astype(jnp.bfloat16), dist, logits.astype(jnp.bfloat16)


def reference_fp32(emb_layers, att_mask, params):
    """Full-f32 reference of the original PyTorch math (loose sanity check)."""
    warc = jax.nn.softmax(params["mix_arc"], axis=0)
    wlbl = jax.nn.softmax(params["mix_lbl"], axis=0)
    emb_arc = jnp.tensordot(warc, emb_layers, axes=(0, 0))
    emb_lbl = jnp.tensordot(wlbl, emb_layers, axes=(0, 0))
    dep = emb_arc @ params["w_arc"].T
    diff = dep[:, :, None, :] - dep[:, None, :, :]
    dist = jnp.sum(diff * diff, axis=-1)
    lin = emb_lbl @ params["w_lbl"].T
    logits = jnp.where(att_mask[..., None], lin, -jnp.inf)
    return dep, dist, logits


# --------------------------------- main --------------------------------------
if __name__ == "__main__":
    key = jax.random.PRNGKey(0)
    L, B, T, E, D = 4, 2, 8, 32, 16                     # layers, batch, seq, emb, dep_dim
    dep_rels = ["det", "nsubj", "obj", "root", "amod", "advmod", "case", "punct"]
    R = len(dep_rels)
    root_label = dep_rels.index("root")

    k_emb, k_arc, k_lbl = jax.random.split(key, 3)
    emb_layers = jax.random.normal(k_emb, (L, B, T, E), dtype=jnp.float32)
    lengths = jnp.array([7, 5], dtype=jnp.int32)
    att_sentences = jnp.arange(T)[None, :] < lengths[:, None]   # (B, T) bool

    params = {
        # nn.Parameter(torch.ones(L)) in __init__:
        "mix_arc": jnp.ones((L,), jnp.float32),
        "mix_lbl": jnp.ones((L,), jnp.float32),
        # nn.Linear(E, D/R, bias=False) weights, shape (out, in):
        "w_arc": 0.1 * jax.random.normal(k_arc, (D, E), dtype=jnp.float32),
        "w_lbl": 0.1 * jax.random.normal(k_lbl, (R, E), dtype=jnp.float32),
    }

    results = depprobe_mix_forward(emb_layers, att_sentences, params, root_label, decode=True)
    jax.block_until_ready(
        (results["dependency_embeddings"], results["distances"], results["label_logits"])
    )

    dep = np.asarray(results["dependency_embeddings"].astype(jnp.float32))
    dist = np.asarray(results["distances"])
    logits = np.asarray(results["label_logits"].astype(jnp.float32))

    # tight check against a precision-matched pure-JAX reference
    m_dep, m_dist, m_logits = reference_matched(emb_layers, att_sentences, params)
    assert np.allclose(dep, np.asarray(m_dep.astype(jnp.float32)), rtol=1e-2, atol=1e-2)
    assert np.allclose(dist, np.asarray(m_dist), rtol=1e-2, atol=1e-2)
    assert np.allclose(logits, np.asarray(m_logits.astype(jnp.float32)), rtol=1e-2, atol=1e-2)

    # loose sanity check against the full-f32 PyTorch-equivalent math
    f_dep, f_dist, f_logits = reference_fp32(emb_layers, att_sentences, params)
    assert np.allclose(dep, np.asarray(f_dep), rtol=5e-2, atol=5e-2)
    assert np.allclose(dist, np.asarray(f_dist), rtol=1e-1, atol=1e-1)
    assert np.allclose(logits, np.asarray(f_logits), rtol=5e-2, atol=5e-2)

    assert results["graphs"].shape == (B, T)
    assert results["labels"].shape == (B, T)

    print("KERNEL_OK")
</pallas_src>

<mosaic_0001>
module attributes {stable_mosaic.version = 11 : i64} {
  func.func @depprobe_mix_kernel(%arg0: i32, %arg1: i32, %arg2: memref<4xf32, #tpu.memory_space<smem>>, %arg3: memref<4xf32, #tpu.memory_space<smem>>, %arg4: memref<1x1x128x32xf32, #tpu.memory_space<vmem>>, %arg5: memref<1x128x1xf32, #tpu.memory_space<vmem>>, %arg6: memref<32x256xbf16, #tpu.memory_space<vmem>>, %arg7: memref<1x128x128xbf16, #tpu.memory_space<vmem>>, %arg8: memref<1x128x128xf32, #tpu.memory_space<vmem>>, %arg9: memref<1x128x128xbf16, #tpu.memory_space<vmem>>, %arg10: memref<128x128xf32, #tpu.memory_space<vmem>>, %arg11: memref<128x128xf32, #tpu.memory_space<vmem>>) attributes {dimension_semantics = [#tpu.dimension_semantics<parallel>, #tpu.dimension_semantics<arbitrary>], iteration_bounds = array<i64: 2, 4>, scalar_prefetch = 0 : i64, scratch_operands = 2 : i64, tpu.core_type = #tpu.core_type<tc>, window_params = [{transform_indices = @transform_0, window_bounds = array<i64: 4>}, {transform_indices = @transform_1, window_bounds = array<i64: 4>}, {transform_indices = @transform_2, window_bounds = array<i64: 1, 1, 128, 32>}, {transform_indices = @transform_3, window_bounds = array<i64: 1, 128, 1>}, {pipeline_mode = #tpu.pipeline_mode<synchronous>, transform_indices = @transform_4, window_bounds = array<i64: 32, 256>}, {transform_indices = @transform_5, window_bounds = array<i64: 1, 128, 128>}, {transform_indices = @transform_6, window_bounds = array<i64: 1, 128, 128>}, {transform_indices = @transform_7, window_bounds = array<i64: 1, 128, 128>}]} {
    %c0_i32 = arith.constant 0 : i32
    %0 = arith.cmpi eq, %arg1, %c0_i32 : i32
    %1 = arith.extui %0 : i1 to i32
    %c0_i32_0 = arith.constant 0 : i32
    %2 = arith.cmpi ne, %1, %c0_i32_0 : i32
    scf.if %2 {
      %cst_15 = arith.constant 0.000000e+00 : f32
      %28 = vector.broadcast %cst_15 : f32 to vector<128x128xf32>
      %c0_16 = arith.constant 0 : index
      %c0_17 = arith.constant 0 : index
      %29 = vector.load %arg10[%c0_16, %c0_17] : memref<128x128xf32, #tpu.memory_space<vmem>>, vector<128x128xf32>
      tpu.vector_store %arg10[%c0_16, %c0_17], %28 {strides = array<i32>} : memref<128x128xf32, #tpu.memory_space<vmem>>, vector<128x128xf32>,
      %cst_18 = arith.constant 0.000000e+00 : f32
      %30 = vector.broadcast %cst_18 : f32 to vector<128x128xf32>
      %c0_19 = arith.constant 0 : index
      %c0_20 = arith.constant 0 : index
      %31 = vector.load %arg11[%c0_19, %c0_20] : memref<128x128xf32, #tpu.memory_space<vmem>>, vector<128x128xf32>
      tpu.vector_store %arg11[%c0_19, %c0_20], %30 {strides = array<i32>} : memref<128x128xf32, #tpu.memory_space<vmem>>, vector<128x128xf32>,
    } else {
    }
    %c0 = arith.constant 0 : index
    %c0_1 = arith.constant 0 : index
    %c0_2 = arith.constant 0 : index
    %c0_3 = arith.constant 0 : index
    %3 = vector.load %arg4[%c0, %c0_1, %c0_2, %c0_3] : memref<1x1x128x32xf32, #tpu.memory_space<vmem>>, vector<1x1x128x32xf32>
    %4 = vector.shape_cast %3 : vector<1x1x128x32xf32> to vector<1x128x32xf32>
    %5 = vector.shape_cast %4 : vector<1x128x32xf32> to vector<128x32xf32>
    %6 = arith.truncf %5 : vector<128x32xf32> to vector<128x32xbf16>
    %c0_4 = arith.constant 0 : index
    %c0_5 = arith.constant 0 : index
    %7 = vector.load %arg6[%c0_4, %c0_5] : memref<32x256xbf16, #tpu.memory_space<vmem>>, vector<32x256xbf16>
    %cst = arith.constant dense<0.000000e+00> : vector<128x256xf32>
    %8 = tpu.matmul %6, %7, %cst {dimension_numbers = #tpu.dot_dimension_numbers<[1], [0], [0], [1], [0, 0, 1, 1], [], []>} : vector<128x32xbf16>, vector<32x256xbf16>, vector<128x256xf32> -> vector<128x256xf32>
    %c0_6 = arith.constant 0 : index
    %c0_7 = arith.constant 0 : index
    %9 = vector.load %arg10[%c0_6, %c0_7] : memref<128x128xf32, #tpu.memory_space<vmem>>, vector<128x128xf32>
    %10 = arith.index_cast %arg1 : i32 to index
    %11 = memref.load %arg2[%10] : memref<4xf32, #tpu.memory_space<smem>>
    %12 = vector.extract_strided_slice %8 {offsets = [0, 0], sizes = [128, 128], strides = [1, 1]} : vector<128x256xf32> to vector<128x128xf32>
    %13 = vector.broadcast %11 : f32 to vector<128x128xf32>
    %14 = arith.mulf %13, %12 : vector<128x128xf32>
    %15 = arith.addf %9, %14 : vector<128x128xf32>
    %c0_8 = arith.constant 0 : index
    %c0_9 = arith.constant 0 : index
    %16 = vector.load %arg10[%c0_8, %c0_9] : memref<128x128xf32, #tpu.memory_space<vmem>>, vector<128x128xf32>
    tpu.vector_store %arg10[%c0_8, %c0_9], %15 {strides = array<i32>} : memref<128x128xf32, #tpu.memory_space<vmem>>, vector<128x128xf32>,
    %c0_10 = arith.constant 0 : index
    %c0_11 = arith.constant 0 : index
    %17 = vector.load %arg11[%c0_10, %c0_11] : memref<128x128xf32, #tpu.memory_space<vmem>>, vector<128x128xf32>
    %18 = arith.index_cast %arg1 : i32 to index
    %19 = memref.load %arg3[%18] : memref<4xf32, #tpu.memory_space<smem>>
    %20 = vector.extract_strided_slice %8 {offsets = [0, 128], sizes = [128, 128], strides = [1, 1]} : vector<128x256xf32> to vector<128x128xf32>
    %21 = vector.broadcast %19 : f32 to vector<128x128xf32>
    %22 = arith.mulf %21, %20 : vector<128x128xf32>
    %23 = arith.addf %17, %22 : vector<128x128xf32>
    %c0_12 = arith.constant 0 : index
    %c0_13 = arith.constant 0 : index
    %24 = vector.load %arg11[%c0_12, %c0_13] : memref<128x128xf32, #tpu.memory_space<vmem>>, vector<128x128xf32>
    tpu.vector_store %arg11[%c0_12, %c0_13], %23 {strides = array<i32>} : memref<128x128xf32, #tpu.memory_space<vmem>>, vector<128x128xf32>,
    %c3_i32 = arith.constant 3 : i32
    %25 = arith.cmpi eq, %arg1, %c3_i32 : i32
    %26 = arith.extui %25 : i1 to i32
    %c0_i32_14 = arith.constant 0 : i32
    %27 = arith.cmpi ne, %26, %c0_i32_14 : i32
    scf.if %27 {
      %c0_15 = arith.constant 0 : index
      %c0_16 = arith.constant 0 : index
      %28 = vector.load %arg10[%c0_15, %c0_16] : memref<128x128xf32, #tpu.memory_space<vmem>>, vector<128x128xf32>
      %29 = vector.shape_cast %28 : vector<128x128xf32> to vector<1x128x128xf32>
      %30 = arith.truncf %29 : vector<1x128x128xf32> to vector<1x128x128xbf16>
      %c0_17 = arith.constant 0 : index
      %c0_18 = arith.constant 0 : index
      %c0_19 = arith.constant 0 : index
      %31 = vector.load %arg7[%c0_17, %c0_18, %c0_19] : memref<1x128x128xbf16, #tpu.memory_space<vmem>>, vector<1x128x128xbf16>
      tpu.vector_store %arg7[%c0_17, %c0_18, %c0_19], %30 {strides = array<i32>} : memref<1x128x128xbf16, #tpu.memory_space<vmem>>, vector<1x128x128xbf16>,
      %c0_20 = arith.constant 0 : index
      %c0_21 = arith.constant 0 : index
      %32 = vector.load %arg11[%c0_20, %c0_21] : memref<128x128xf32, #tpu.memory_space<vmem>>, vector<128x128xf32>
      %33 = vector.shape_cast %32 : vector<128x128xf32> to vector<1x128x128xf32>
      %c0_22 = arith.constant 0 : index
      %c0_23 = arith.constant 0 : index
      %c0_24 = arith.constant 0 : index
      %34 = vector.load %arg5[%c0_22, %c0_23, %c0_24] : memref<1x128x1xf32, #tpu.memory_space<vmem>>, vector<1x128x1xf32>
      %35 = vector.broadcast %34 : vector<1x128x1xf32> to vector<1x128x128xf32>
      %36 = arith.addf %33, %35 : vector<1x128x128xf32>
      %37 = arith.truncf %36 : vector<1x128x128xf32> to vector<1x128x128xbf16>
      %c0_25 = arith.constant 0 : index
      %c0_26 = arith.constant 0 : index
      %c0_27 = arith.constant 0 : index
      %38 = vector.load %arg9[%c0_25, %c0_26, %c0_27] : memref<1x128x128xbf16, #tpu.memory_space<vmem>>, vector<1x128x128xbf16>
      tpu.vector_store %arg9[%c0_25, %c0_26, %c0_27], %37 {strides = array<i32>} : memref<1x128x128xbf16, #tpu.memory_space<vmem>>, vector<1x128x128xbf16>,
      %cst_28 = arith.constant 1.000000e+00 : f32
      %39 = vector.broadcast %cst_28 : f32 to vector<1x128xf32>
      %40 = arith.mulf %28, %28 : vector<128x128xf32>
      %cst_29 = arith.constant dense<0.000000e+00> : vector<128x128xf32>
      %41 = tpu.matmul %28, %28, %cst_29 {dimension_numbers = #tpu.dot_dimension_numbers<[1], [1], [0], [0], [0, 0, 1, 0], [], []>} : vector<128x128xf32>, vector<128x128xf32>, vector<128x128xf32> -> vector<128x128xf32>
      %cst_30 = arith.constant dense<0.000000e+00> : vector<128xf32>
      %42 = vector.multi_reduction <add>, %40, %cst_30 [1] : vector<128x128xf32> to vector<128xf32>
      %43 = vector.shape_cast %42 : vector<128xf32> to vector<128x1xf32>
      %cst_31 = arith.constant dense<0.000000e+00> : vector<1x128xf32>
      %44 = tpu.matmul %39, %40, %cst_31 {dimension_numbers = #tpu.dot_dimension_numbers<[1], [1], [0], [0], [0, 0, 1, 0], [], []>} : vector<1x128xf32>, vector<128x128xf32>, vector<1x128xf32> -> vector<1x128xf32>
      %45 = vector.broadcast %43 : vector<128x1xf32> to vector<128x128xf32>
      %46 = vector.broadcast %44 : vector<1x128xf32> to vector<128x128xf32>
      %47 = arith.addf %45, %46 : vector<128x128xf32>
      %cst_32 = arith.constant 2.000000e+00 : f32
      %48 = vector.broadcast %cst_32 : f32 to vector<128x128xf32>
      %49 = arith.mulf %48, %41 : vector<128x128xf32>
      %50 = arith.subf %47, %49 : vector<128x128xf32>
      %cst_33 = arith.constant 0.000000e+00 : f32
      %51 = vector.broadcast %cst_33 : f32 to vector<128x128xf32>
      %52 = arith.maximumf %50, %51 : vector<128x128xf32>
      %c0_34 = arith.constant 0 : index
      %c0_35 = arith.constant 0 : index
      %c0_36 = arith.constant 0 : index
      %53 = vector.load %arg8[%c0_34, %c0_35, %c0_36] : memref<1x128x128xf32, #tpu.memory_space<vmem>>, vector<1x128x128xf32>
      %54 = vector.shape_cast %53 : vector<1x128x128xf32> to vector<128x128xf32>
      %55 = vector.shape_cast %52 : vector<128x128xf32> to vector<1x128x128xf32>
      tpu.vector_store %arg8[%c0_34, %c0_35, %c0_36], %55 {strides = array<i32>} : memref<1x128x128xf32, #tpu.memory_space<vmem>>, vector<1x128x128xf32>,
    } else {
    }
    return
  }
  func.func @transform_0(%arg0: i32, %arg1: i32) -> i32 {
    %c0_i32 = arith.constant 0 : i32
    %c0_i32_0 = arith.constant 0 : i32
    return %c0_i32 : i32
  }
  func.func @transform_1(%arg0: i32, %arg1: i32) -> i32 {
    %c0_i32 = arith.constant 0 : i32
    %c0_i32_0 = arith.constant 0 : i32
    return %c0_i32 : i32
  }
  func.func @transform_2(%arg0: i32, %arg1: i32) -> (i32, i32, i32, i32) {
    %c0_i32 = arith.constant 0 : i32
    %c0_i32_0 = arith.constant 0 : i32
    %c0_i32_1 = arith.constant 0 : i32
    return %arg1, %arg0, %c0_i32, %c0_i32_0 : i32, i32, i32, i32
  }
  func.func @transform_3(%arg0: i32, %arg1: i32) -> (i32, i32, i32) {
    %c0_i32 = arith.constant 0 : i32
    %c0_i32_0 = arith.constant 0 : i32
    %c0_i32_1 = arith.constant 0 : i32
    return %arg0, %c0_i32, %c0_i32_0 : i32, i32, i32
  }
  func.func @transform_4(%arg0: i32, %arg1: i32) -> (i32, i32) {
    %c0_i32 = arith.constant 0 : i32
    %c0_i32_0 = arith.constant 0 : i32
    %c0_i32_1 = arith.constant 0 : i32
    return %c0_i32, %c0_i32_0 : i32, i32
  }
  func.func @transform_5(%arg0: i32, %arg1: i32) -> (i32, i32, i32) {
    %c0_i32 = arith.constant 0 : i32
    %c0_i32_0 = arith.constant 0 : i32
    %c0_i32_1 = arith.constant 0 : i32
    return %arg0, %c0_i32, %c0_i32_0 : i32, i32, i32
  }
  func.func @transform_6(%arg0: i32, %arg1: i32) -> (i32, i32, i32) {
    %c0_i32 = arith.constant 0 : i32
    %c0_i32_0 = arith.constant 0 : i32
    %c0_i32_1 = arith.constant 0 : i32
    return %arg0, %c0_i32, %c0_i32_0 : i32, i32, i32
  }
  func.func @transform_7(%arg0: i32, %arg1: i32) -> (i32, i32, i32) {
    %c0_i32 = arith.constant 0 : i32
    %c0_i32_0 = arith.constant 0 : i32
    %c0_i32_1 = arith.constant 0 : i32
    return %arg0, %c0_i32, %c0_i32_0 : i32, i32, i32
  }
}

</mosaic_0001>

<llo_original>
// kernel: tpu_custom_call.1
$region0: #{tpu_custom_call.1}
  #allocation0 [shape = 'u32[]', space=smem, size = 0x4, offset = 0x4, fixed_abs, tag = 'smem constant byte address 0x4 - core index']
  #allocation1 [shape = 'u32[144,128]{1,0:T(1,128)}', space=vmem, size = 0x12000, scoped, tag = 'internal scratch']
  #allocation2 [shape = 'f32[128,128]{1,0:T(8,128)}', space=vmem, size = 0x10000, scoped, tag = 'scratch operand']
  #allocation3 [shape = 'f32[128,128]{1,0:T(8,128)}', space=vmem, size = 0x10000, scoped, tag = 'scratch operand']
  %s0 = inlined_call_operand.vmem [shape: f32[4], index: 0, kind: input, shape index: {}]
  %s1 = inlined_call_operand.vmem [shape: f32[4], index: 1, kind: input, shape index: {}]
  %s2 = inlined_call_operand.vmem [shape: f32[4,2,128,32], index: 2, kind: input, shape index: {}]
  %s3 = inlined_call_operand.vmem [shape: f32[2,128,1], index: 3, kind: input, shape index: {}]
  %s4 = inlined_call_operand.vmem [shape: bf16[32,256], index: 4, kind: input, shape index: {}]
  %s5 = inlined_call_operand.hbm [shape: bf16[2,128,128], index: 5, kind: output, shape index: {0}]
  %s6 = inlined_call_operand.hbm [shape: f32[2,128,128], index: 6, kind: output, shape index: {1}]
  %s7 = inlined_call_operand.hbm [shape: bf16[2,128,128], index: 7, kind: output, shape index: {2}]
  %8 = xla_tuple %s5, %s6, %s7
  %s9 = sld [smem:[#allocation0]]
  $region85: #{tpu_custom_call.1} parent=0
    _
  %s11 = ssub.s32 1, %s9
  %s12 = scalar_select 0, %s11, %s9
  $region1: #{tpu_custom_call.1} parent=0
    #allocation4 [shape = 'u8[512]{0}', space=smem, size = 0x200, scoped, tag = 'input window, operand 0, single buffered']
    #allocation5 [shape = 's32[2]{0}', space=sflag, size = 0x8, scoped, tag = 'scoped memory for tpu_custom_call.1']
    #allocation6 [shape = 's32[2]{0}', space=sflag, size = 0x8, scoped, tag = 'scoped memory for tpu_custom_call.1']
    #allocation7 [shape = 'u8[512]{0}', space=smem, size = 0x200, scoped, tag = 'input window, operand 1, single buffered']
    #allocation8 [shape = 's32[1]{0}', space=sflag, size = 0x4, scoped, tag = 'scoped memory for tpu_custom_call.1']
    #allocation9 [shape = 'u8[65536]{0}', space=vmem, size = 0x10000, scoped, tag = 'output window, operand 0']
    #allocation10 [shape = 'u8[131072]{0}', space=vmem, size = 0x20000, scoped, tag = 'output window, operand 1']
    #allocation11 [shape = 's32[2]{0}', space=sflag, size = 0x8, scoped, tag = 'scoped memory for tpu_custom_call.1']
    #allocation12 [shape = 'u8[65536]{0}', space=vmem, size = 0x10000, scoped, tag = 'output window, operand 2']
    %13 = vsyncpa [#allocation6], 0
    %14 = vsyncpa [#allocation8], 0
    %15 = vsyncpa [#allocation5], 0
    %s16 = scalar_lea.sflag [#allocation5], 1
    %17 = vsyncpa %s16, 0
    %18 = vsyncpa [#allocation11], 0
    %s19 = scalar_lea.sflag [#allocation11], 1
    %20 = vsyncpa %s19, 0
    loop: start=0, step=1, limit=10
    $region2: #{tpu_custom_call.1} parent=1 // loop_pre_header
      _
    $region3: #{tpu_custom_call.1} parent=1 // loop_header
      %s22 = sphi 0, %s26
      %p23 = scmp.ge.s32.totalorder %s22, 10
      %s29 = sphi 0, %s41
      %s30 = sphi 0, %s37
      %s31 = sphi 0, %s29
      %s32 = sphi 0, %s30
      %s33 = sphi 0, %s31
      %s34 = sphi 0, %s32
      %s42 = sphi 0, %s42
      %s44 = sphi 0, %s42
      %s45 = sphi 0, %s44
      %s59 = sphi 0, %s45
      %s63 = sphi 0, %s63
      %s65 = sphi 0, %s63
      %s66 = sphi 0, %s65
      %s80 = sphi 0, %s66
      %s88 = sphi 0, %s90
      %s91 = sphi 0, %s88
      %s92 = sphi 0, %s91
      %s108 = sphi 0, %s92
      %s114 = sphi 0, %s116
      %s117 = sphi 0, %s114
      %s118 = sphi 0, %s117
      %s134 = sphi 0, %s118
      %s138 = sphi 0, %s138
      %s140 = sphi 0, %s138
      %s141 = sphi 0, %s140
      %s155 = sphi 0, %s141
      %s161 = sphi 0, %s163
      %s164 = sphi 0, %s161
      %s165 = sphi 0, %s164
      %s181 = sphi 0, %s165
      %s187 = sphi 0, %s189
      %s190 = sphi 0, %s187
      %s191 = sphi 0, %s190
      %s207 = sphi 0, %s191
      %s213 = sphi 0, %s215
      %s216 = sphi 0, %s213
      %s217 = sphi 0, %s216
      %s233 = sphi 0, %s217
    $region4: #{tpu_custom_call.1} parent=1 // loop_header_branch
      %25 = sbr.rel (%p23) target = $region8
    $region5: #{tpu_custom_call.1} parent=1 // loop_body
      %s27 = ssub.s32 %s22, 1
      %s28 = ssub.s32 %s22, 2
      %s35 = sadd.s32 1, %s30
      %p36 = scmp.ge.s32.totalorder %s35, 4
      %s37 = scalar_select %p36, 0, %s35
      %s38 = sadd.s32 1, %s29
      %s39 = scalar_select %p36, %s38, %s29
      %p40 = scmp.ge.s32.totalorder %s39, 2
      %s41 = scalar_select %p40, 0, %s39
      %s43 = sadd.s32 %s42, 1
      %p46 = scmp.eq.s32.totalorder %s22, 7
      %p47 = scmp.ne.s32.totalorder %s42, %s44
      %p48 = scmp.eq.s32.totalorder %s22, 0
      %p49 = por %p47, %p48
      %p50 = scmp.ne.s32.totalorder %s42, %s44
      %p51 = scmp.eq.s32.totalorder %s27, 7
      %p52 = por %p50, %p51
      %p53 = scmp.ne.s32.totalorder %s44, %s45
      %p54 = scmp.eq.s32.totalorder %s27, 0
      %p55 = por %p53, %p54
      %p56 = scmp.ne.s32.totalorder %s44, %s45
      %p57 = scmp.eq.s32.totalorder %s28, 7
      %p58 = por %p56, %p57
      %p60 = scmp.ne.s32.totalorder %s45, %s59
      %p61 = scmp.eq.s32.totalorder %s28, 0
      %p62 = por %p60, %p61
      %s64 = sadd.s32 %s63, 1
      %p67 = scmp.eq.s32.totalorder %s22, 7
      %p68 = scmp.ne.s32.totalorder %s63, %s65
      %p69 = scmp.eq.s32.totalorder %s22, 0
      %p70 = por %p68, %p69
      %p71 = scmp.ne.s32.totalorder %s63, %s65
      %p72 = scmp.eq.s32.totalorder %s27, 7
      %p73 = por %p71, %p72
      %p74 = scmp.ne.s32.totalorder %s65, %s66
      %p75 = scmp.eq.s32.totalorder %s27, 0
      %p76 = por %p74, %p75
      %p77 = scmp.ne.s32.totalorder %s65, %s66
      %p78 = scmp.eq.s32.totalorder %s28, 7
      %p79 = por %p77, %p78
      %p81 = scmp.ne.s32.totalorder %s66, %s80
      %p82 = scmp.eq.s32.totalorder %s28, 0
      %p83 = por %p81, %p82
      %s84 = ssub.s32 %s30, %s37
      %s85 = ssub.s32 %s29, %s41
      %s86 = sor.u32 %s84, %s85
      %p87 = scmp.eq.s32.totalorder %s86, 0
      %s89 = sadd.s32 %s88, 1
      %s90 = scalar_select %p87, %s88, %s89
      %p93 = pneg %p87
      %p94 = scmp.eq.s32.totalorder %s22, 7
      %p95 = por %p93, %p94
      %p96 = scmp.ne.s32.totalorder %s88, %s91
      %p97 = scmp.eq.s32.totalorder %s22, 0
      %p98 = por %p96, %p97
      %p99 = scmp.ne.s32.totalorder %s88, %s91
      %p100 = scmp.eq.s32.totalorder %s27, 7
      %p101 = por %p99, %p100
      %p102 = scmp.ne.s32.totalorder %s91, %s92
      %p103 = scmp.eq.s32.totalorder %s27, 0
      %p104 = por %p102, %p103
      %p105 = scmp.ne.s32.totalorder %s91, %s92
      %p106 = scmp.eq.s32.totalorder %s28, 7
      %p107 = por %p105, %p106
      %p109 = scmp.ne.s32.totalorder %s92, %s108
      %p110 = scmp.eq.s32.totalorder %s28, 0
      %p111 = por %p109, %p110
      %s112 = ssub.s32 %s29, %s41
      %p113 = scmp.eq.s32.totalorder %s112, 0
      %s115 = sadd.s32 %s114, 1
      %s116 = scalar_select %p113, %s114, %s115
      %p119 = pneg %p113
      %p120 = scmp.eq.s32.totalorder %s22, 7
      %p121 = por %p119, %p120
      %p122 = scmp.ne.s32.totalorder %s114, %s117
      %p123 = scmp.eq.s32.totalorder %s22, 0
      %p124 = por %p122, %p123
      %p125 = scmp.ne.s32.totalorder %s114, %s117
      %p126 = scmp.eq.s32.totalorder %s27, 7
      %p127 = por %p125, %p126
      %p128 = scmp.ne.s32.totalorder %s117, %s118
      %p129 = scmp.eq.s32.totalorder %s27, 0
      %p130 = por %p128, %p129
      %p131 = scmp.ne.s32.totalorder %s117, %s118
      %p132 = scmp.eq.s32.totalorder %s28, 7
      %p133 = por %p131, %p132
      %p135 = scmp.ne.s32.totalorder %s118, %s134
      %p136 = scmp.eq.s32.totalorder %s28, 0
      %p137 = por %p135, %p136
      %s139 = sadd.s32 %s138, 1
      %p142 = scmp.eq.s32.totalorder %s22, 7
      %p143 = scmp.ne.s32.totalorder %s138, %s140
      %p144 = scmp.eq.s32.totalorder %s22, 0
      %p145 = por %p143, %p144
      %p146 = scmp.ne.s32.totalorder %s138, %s140
      %p147 = scmp.eq.s32.totalorder %s27, 7
      %p148 = por %p146, %p147
      %p149 = scmp.ne.s32.totalorder %s140, %s141
      %p150 = scmp.eq.s32.totalorder %s27, 0
      %p151 = por %p149, %p150
      %p152 = scmp.ne.s32.totalorder %s140, %s141
      %p153 = scmp.eq.s32.totalorder %s28, 7
      %p154 = por %p152, %p153
      %p156 = scmp.ne.s32.totalorder %s141, %s155
      %p157 = scmp.eq.s32.totalorder %s28, 0
      %p158 = por %p156, %p157
      %s159 = ssub.s32 %s29, %s41
      %p160 = scmp.eq.s32.totalorder %s159, 0
      %s162 = sadd.s32 %s161, 1
      %s163 = scalar_select %p160, %s161, %s162
      %p166 = pneg %p160
      %p167 = scmp.eq.s32.totalorder %s22, 7
      %p168 = por %p166, %p167
      %p169 = scmp.ne.s32.totalorder %s161, %s164
      %p170 = scmp.eq.s32.totalorder %s22, 0
      %p171 = por %p169, %p170
      %p172 = scmp.ne.s32.totalorder %s161, %s164
      %p173 = scmp.eq.s32.totalorder %s27, 7
      %p174 = por %p172, %p173
      %p175 = scmp.ne.s32.totalorder %s164, %s165
      %p176 = scmp.eq.s32.totalorder %s27, 0
      %p177 = por %p175, %p176
      %p178 = scmp.ne.s32.totalorder %s164, %s165
      %p179 = scmp.eq.s32.totalorder %s28, 7
      %p180 = por %p178, %p179
      %p182 = scmp.ne.s32.totalorder %s165, %s181
      %p183 = scmp.eq.s32.totalorder %s28, 0
      %p184 = por %p182, %p183
      %s185 = ssub.s32 %s29, %s41
      %p186 = scmp.eq.s32.totalorder %s185, 0
      %s188 = sadd.s32 %s187, 1
      %s189 = scalar_select %p186, %s187, %s188
      %p192 = pneg %p186
      %p193 = scmp.eq.s32.totalorder %s22, 7
      %p194 = por %p192, %p193
      %p195 = scmp.ne.s32.totalorder %s187, %s190
      %p196 = scmp.eq.s32.totalorder %s22, 0
      %p197 = por %p195, %p196
      %p198 = scmp.ne.s32.totalorder %s187, %s190
      %p199 = scmp.eq.s32.totalorder %s27, 7
      %p200 = por %p198, %p199
      %p201 = scmp.ne.s32.totalorder %s190, %s191
      %p202 = scmp.eq.s32.totalorder %s27, 0
      %p203 = por %p201, %p202
      %p204 = scmp.ne.s32.totalorder %s190, %s191
      %p205 = scmp.eq.s32.totalorder %s28, 7
      %p206 = por %p204, %p205
      %p208 = scmp.ne.s32.totalorder %s191, %s207
      %p209 = scmp.eq.s32.totalorder %s28, 0
      %p210 = por %p208, %p209
      %s211 = ssub.s32 %s29, %s41
      %p212 = scmp.eq.s32.totalorder %s211, 0
      %s214 = sadd.s32 %s213, 1
      %s215 = scalar_select %p212, %s213, %s214
      %p218 = pneg %p212
      %p219 = scmp.eq.s32.totalorder %s22, 7
      %p220 = por %p218, %p219
      %p221 = scmp.ne.s32.totalorder %s213, %s216
      %p222 = scmp.eq.s32.totalorder %s22, 0
      %p223 = por %p221, %p222
      %p224 = scmp.ne.s32.totalorder %s213, %s216
      %p225 = scmp.eq.s32.totalorder %s27, 7
      %p226 = por %p224, %p225
      %p227 = scmp.ne.s32.totalorder %s216, %s217
      %p228 = scmp.eq.s32.totalorder %s27, 0
      %p229 = por %p227, %p228
      %p230 = scmp.ne.s32.totalorder %s216, %s217
      %p231 = scmp.eq.s32.totalorder %s28, 7
      %p232 = por %p230, %p231
      %p234 = scmp.ne.s32.totalorder %s217, %s233
      %p235 = scmp.eq.s32.totalorder %s28, 0
      %p236 = por %p234, %p235
      %p237 = scmp.le.s32.totalorder 1, %s22
      %p238 = scmp.lt.s32.totalorder %s22, 9
      %p239 = pnand %p237, %p238
      %p240 = pneg %p239
      // Predicated region
      $region9: #{tpu_custom_call.1} parent=5 // pred_check
        _
      $region10: #{tpu_custom_call.1} parent=5 // pred_check_branch
        %242 = sbr.rel (%p239) target = $region12
      $region11: #{tpu_custom_call.1} parent=5 // pred_region
        %s243 = ssub.s32 %s22, 1
        // Predicated region
        $region13: #{tpu_custom_call.1} parent=11 // pred_check
          %p244 = pneg %p55
        $region14: #{tpu_custom_call.1} parent=11 // pred_check_branch
          %246 = sbr.rel (%p244) target = $region16
        $region15: #{tpu_custom_call.1} parent=11 // pred_region
          %s248 = ssub.s32 16, 16
          %249 = vsyncadd [#allocation6], %s248
          %s251 = sshll.u32 %s0, 4
          %s252 = int_to_ptr.vmem [resolvable:$true] %s251
          %254 = dma.vmem_to_smem %s252, 16, [#allocation4], [#allocation6]
        $region16: #{tpu_custom_call.1} parent=11 // pred_fallthru
          _
        // Predicated region
        $region17: #{tpu_custom_call.1} parent=11 // pred_check
          %p255 = pneg %p76
        $region18: #{tpu_custom_call.1} parent=11 // pred_check_branch
          %257 = sbr.rel (%p255) target = $region20
        $region19: #{tpu_custom_call.1} parent=11 // pred_region
          %s259 = ssub.s32 16, 16
          %260 = vsyncadd [#allocation8], %s259
          %s262 = sshll.u32 %s1, 4
          %s263 = int_to_ptr.vmem [resolvable:$true] %s262
          %265 = dma.vmem_to_smem %s263, 16, [#allocation7], [#allocation8]
        $region20: #{tpu_custom_call.1} parent=11 // pred_fallthru
          _
        // Predicated region
        $region21: #{tpu_custom_call.1} parent=11 // pred_check
          %p266 = pneg %p151
        $region22: #{tpu_custom_call.1} parent=11 // pred_check_branch
          %268 = sbr.rel (%p266) target = $region24
        $region23: #{tpu_custom_call.1} parent=11 // pred_region
          _
        $region24: #{tpu_custom_call.1} parent=11 // pred_fallthru
          _
      $region12: #{tpu_custom_call.1} parent=5 // pred_fallthru
        _
      %p269 = scmp.lt.s32.totalorder %s22, 8
      // Predicated region
      $region25: #{tpu_custom_call.1} parent=5 // pred_check
        %p270 = pneg %p269
      $region26: #{tpu_custom_call.1} parent=5 // pred_check_branch
        %272 = sbr.rel (%p270) target = $region28
      $region27: #{tpu_custom_call.1} parent=5 // pred_region
        // Predicated region
        $region29: #{tpu_custom_call.1} parent=27 // pred_check
          %p273 = pneg %p98
        $region30: #{tpu_custom_call.1} parent=27 // pred_check_branch
          %275 = sbr.rel (%p273) target = $region32
        $region31: #{tpu_custom_call.1} parent=27 // pred_region
          %p276 = scmp.lt.s32.totalorder %s30, 3
          %s277 = scalar_select %p276, %s30, 3
          %p278 = scmp.lt.s32.totalorder %s29, 1
          %s279 = scalar_select %p278, %s29, 1
          %s280 = smul.addr %s279, 16
          %s281 = smul.addr %s277, 32
          %s282 = sadd.s32 %s280, %s281
          %s283 = smul.addr %s282, 8
          %s284 = scalar_lea.vmem %s2, %s283
        $region32: #{tpu_custom_call.1} parent=27 // pred_fallthru
          _
        // Predicated region
        $region33: #{tpu_custom_call.1} parent=27 // pred_check
          %p285 = pneg %p124
        $region34: #{tpu_custom_call.1} parent=27 // pred_check_branch
          %287 = sbr.rel (%p285) target = $region36
        $region35: #{tpu_custom_call.1} parent=27 // pred_region
          %p288 = scmp.lt.s32.totalorder %s29, 1
          %s289 = scalar_select %p288, %s29, 1
          %s290 = smul.addr %s289, 16
          %s291 = smul.addr %s290, 8
          %s292 = scalar_lea.vmem %s3, %s291
        $region36: #{tpu_custom_call.1} parent=27 // pred_fallthru
          _
      $region28: #{tpu_custom_call.1} parent=5 // pred_fallthru
        _
      %p293 = scmp.le.s32.totalorder 1, %s22
      %p294 = scmp.lt.s32.totalorder %s22, 9
      %p295 = pnand %p293, %p294
      %p296 = pneg %p295
      // Predicated region
      $region37: #{tpu_custom_call.1} parent=5 // pred_check
        _
      $region38: #{tpu_custom_call.1} parent=5 // pred_check_branch
        %298 = sbr.rel (%p295) target = $region40
      $region39: #{tpu_custom_call.1} parent=5 // pred_region
        %s299 = ssub.s32 %s22, 1
        // Predicated region
        $region41: #{tpu_custom_call.1} parent=39 // pred_check
          %p300 = pneg %p55
        $region42: #{tpu_custom_call.1} parent=39 // pred_check_branch
          %302 = sbr.rel (%p300) target = $region44
        $region43: #{tpu_custom_call.1} parent=39 // pred_region
          %303 = dma.done [#allocation6], 16
        $region44: #{tpu_custom_call.1} parent=39 // pred_fallthru
          _
        // Predicated region
        $region45: #{tpu_custom_call.1} parent=39 // pred_check
          %p304 = pneg %p76
        $region46: #{tpu_custom_call.1} parent=39 // pred_check_branch
          %306 = sbr.rel (%p304) target = $region48
        $region47: #{tpu_custom_call.1} parent=39 // pred_region
          %307 = dma.done [#allocation8], 16
        $region48: #{tpu_custom_call.1} parent=39 // pred_fallthru
          _
        %308 = sfence
        %p309 = pneg %p55
        %p310 = pneg %p52
        %p311 = pneg %p76
        %p312 = pneg %p73
        %p313 = scmp.lt.s32.totalorder %s32, 3
        %s314 = scalar_select %p313, %s32, 3
        %p315 = scmp.lt.s32.totalorder %s31, 1
        %s316 = scalar_select %p315, %s31, 1
        %s317 = smul.addr %s316, 16
        %s318 = smul.addr %s314, 32
        %s319 = sadd.s32 %s317, %s318
        %s320 = smul.addr %s319, 8
        %s321 = scalar_lea.vmem %s2, %s320
        %p322 = pneg %p104
        %p323 = pneg %p101
        %p324 = scmp.lt.s32.totalorder %s31, 1
        %s325 = scalar_select %p324, %s31, 1
        %s326 = smul.addr %s325, 16
        %s327 = smul.addr %s326, 8
        %s328 = scalar_lea.vmem %s3, %s327
        %p329 = pneg %p130
        %p330 = pneg %p127
        %p331 = pneg %p151
        %p332 = pneg %p148
        %p333 = pneg %p177
        %p334 = pneg %p174
        %s335 = sand.u32 %s164, 1
        %s336 = scalar_lea.sflag [#allocation5], %s335
        %s337 = sand.u32 %s164, 1
        %s338 = smul.addr %s337, 64
        %s339 = scalar_lea.vmem [#allocation9], %s338
        %p340 = pneg %p203
        %p341 = pneg %p200
        %s342 = sand.u32 %s27, 1
        %s343 = scalar_lea.sflag [#allocation11], %s342
        %s344 = sand.u32 %s190, 1
        %s345 = smul.addr %s344, 128
        %s346 = scalar_lea.vmem [#allocation10], %s345
        %p347 = pneg %p229
        %p348 = pneg %p226
        %s349 = sand.u32 %s27, 1
        %s350 = scalar_lea.sflag [#allocation11], %s349
        %s351 = sand.u32 %s216, 1
        %s352 = smul.addr %s351, 64
        %s353 = scalar_lea.vmem [#allocation12], %s352
        %p354 = scmp.lt.s32.totalorder %s32, 3
        %s355 = scalar_select %p354, %s32, 3
        %p356 = scmp.lt.s32.totalorder %s31, 1
        %s357 = scalar_select %p356, %s31, 1
        %s358 = smul.addr %s357, 16
        %s359 = smul.addr %s355, 32
        %s360 = sadd.s32 %s358, %s359
        %s361 = smul.addr %s360, 8
        %s362 = scalar_lea.vmem %s2, %s361
        %p363 = scmp.lt.s32.totalorder %s31, 1
        %s364 = scalar_select %p363, %s31, 1
        %s365 = smul.addr %s364, 16
        %s366 = smul.addr %s365, 8
        %s367 = scalar_lea.vmem %s3, %s366
        %p369 = scmp.eq.s32.totalorder %s32, 0
        // Predicated region
        $region49: #{tpu_custom_call.1} parent=39 // pred_check
          %p370 = pneg %p369
        $region50: #{tpu_custom_call.1} parent=39 // pred_check_branch
          %372 = sbr.rel (%p370) target = $region52
        $region51: #{tpu_custom_call.1} parent=39 // pred_region
          %373 = vst [vmem:[#allocation2] sm:$0xff] 0.0
          %374 = vst [vmem:[#allocation2 + $0x8] sm:$0xff] 0.0
          %375 = vst [vmem:[#allocation2 + $0x10] sm:$0xff] 0.0
          %376 = vst [vmem:[#allocation2 + $0x18] sm:$0xff] 0.0
          %377 = vst [vmem:[#allocation2 + $0x20] sm:$0xff] 0.0
          %378 = vst [vmem:[#allocation2 + $0x28] sm:$0xff] 0.0
          %379 = vst [vmem:[#allocation2 + $0x30] sm:$0xff] 0.0
          %380 = vst [vmem:[#allocation2 + $0x38] sm:$0xff] 0.0
          %381 = vst [vmem:[#allocation2 + $0x40] sm:$0xff] 0.0
          %382 = vst [vmem:[#allocation2 + $0x48] sm:$0xff] 0.0
          %383 = vst [vmem:[#allocation2 + $0x50] sm:$0xff] 0.0
          %384 = vst [vmem:[#allocation2 + $0x58] sm:$0xff] 0.0
          %385 = vst [vmem:[#allocation2 + $0x60] sm:$0xff] 0.0
          %386 = vst [vmem:[#allocation2 + $0x68] sm:$0xff] 0.0
          %387 = vst [vmem:[#allocation2 + $0x70] sm:$0xff] 0.0
          %388 = vst [vmem:[#allocation2 + $0x78] sm:$0xff] 0.0
          %389 = vst [vmem:[#allocation3] sm:$0xff] 0.0
          %390 = vst [vmem:[#allocation3 + $0x8] sm:$0xff] 0.0
          %391 = vst [vmem:[#allocation3 + $0x10] sm:$0xff] 0.0
          %392 = vst [vmem:[#allocation3 + $0x18] sm:$0xff] 0.0
          %393 = vst [vmem:[#allocation3 + $0x20] sm:$0xff] 0.0
          %394 = vst [vmem:[#allocation3 + $0x28] sm:$0xff] 0.0
          %395 = vst [vmem:[#allocation3 + $0x30] sm:$0xff] 0.0
          %396 = vst [vmem:[#allocation3 + $0x38] sm:$0xff] 0.0
          %397 = vst [vmem:[#allocation3 + $0x40] sm:$0xff] 0.0
          %398 = vst [vmem:[#allocation3 + $0x48] sm:$0xff] 0.0
          %399 = vst [vmem:[#allocation3 + $0x50] sm:$0xff] 0.0
          %400 = vst [vmem:[#allocation3 + $0x58] sm:$0xff] 0.0
          %401 = vst [vmem:[#allocation3 + $0x60] sm:$0xff] 0.0
          %402 = vst [vmem:[#allocation3 + $0x68] sm:$0xff] 0.0
          %403 = vst [vmem:[#allocation3 + $0x70] sm:$0xff] 0.0
          %404 = vst [vmem:[#allocation3 + $0x78] sm:$0xff] 0.0
        $region52: #{tpu_custom_call.1} parent=39 // pred_fallthru
          _
        %v405 = vld [vmem:[%s362] sm:$0xff]
        %v406 = vld [vmem:[%s362 + $0x8] sm:$0xff]
        %v407 = vld [vmem:[%s362 + $0x10] sm:$0xff]
        %v408 = vld [vmem:[%s362 + $0x18] sm:$0xff]
        %v409 = vld [vmem:[%s362 + $0x20] sm:$0xff]
        %v410 = vld [vmem:[%s362 + $0x28] sm:$0xff]
        %v411 = vld [vmem:[%s362 + $0x30] sm:$0xff]
        %v412 = vld [vmem:[%s362 + $0x38] sm:$0xff]
        %v413 = vld [vmem:[%s362 + $0x40] sm:$0xff]
        %v414 = vld [vmem:[%s362 + $0x48] sm:$0xff]
        %v415 = vld [vmem:[%s362 + $0x50] sm:$0xff]
        %v416 = vld [vmem:[%s362 + $0x58] sm:$0xff]
        %v417 = vld [vmem:[%s362 + $0x60] sm:$0xff]
        %v418 = vld [vmem:[%s362 + $0x68] sm:$0xff]
        %v419 = vld [vmem:[%s362 + $0x70] sm:$0xff]
        %v420 = vld [vmem:[%s362 + $0x78] sm:$0xff]
        %v421 = vpack.c.bf16 %v406, %v405
        %v422 = vpack.c.bf16 %v408, %v407
        %v423 = vpack.c.bf16 %v410, %v409
        %v424 = vpack.c.bf16 %v412, %v411
        %v425 = vpack.c.bf16 %v414, %v413
        %v426 = vpack.c.bf16 %v416, %v415
        %v427 = vpack.c.bf16 %v418, %v417
        %v428 = vpack.c.bf16 %v420, %v419
        %v429 = vld [vmem:[%s4] sm:$0xff]
        %v430 = vld [vmem:[%s4 + $0x8] sm:$0xff]
        %v431 = vld [vmem:[%s4 + $0x10] sm:$0xff]
        %v432 = vld [vmem:[%s4 + $0x18] sm:$0xff]
        %v437 = vunpack.c.l.b16 %v429
        %v438 = vunpack.c.h.b16 %v429
        %v439 = vunpack.c.l.b16 %v430
        %v440 = vunpack.c.h.b16 %v430
        %v441 = vunpack.c.l.b16 %v431
        %v442 = vunpack.c.h.b16 %v431
        %v443 = vunpack.c.l.b16 %v432
        %v444 = vunpack.c.h.b16 %v432
        %v445 = vpack.c.b16 %v439, %v437
        %v446 = vpack.c.b16 %v440, %v438
        %v447 = vpack.c.b16 %v443, %v441
        %v448 = vpack.c.b16 %v444, %v442
        %vm453 = vcmask 261120
        %v455 = vsel %vm453, %v421, 0
        %v458 = vsel %vm453, %v422, 0
        %v461 = vsel %vm453, %v423, 0
        %v464 = vsel %vm453, %v424, 0
        %v467 = vsel %vm453, %v425, 0
        %v470 = vsel %vm453, %v426, 0
        %v473 = vsel %vm453, %v427, 0
        %v476 = vsel %vm453, %v428, 0
        %478 = vmatprep.subr.bf16.mxu0 %v446
        %479 = vmatpush1.bf16.msra.mxu0 %v445
        %480 = vmatprep.subr.bf16.mxu0 %v448
        %481 = vmatpush1.bf16.msra.mxu0 %v447
        %482 = vmatprep.subr.bf16.mxu0 0
        %483 = vmatpush1.bf16.msra.mxu0 0
        %484 = vmatprep.subr.bf16.mxu0 0
        %485 = vmatpush1.bf16.msra.mxu0 0
        %486 = vmatprep.subr.bf16.mxu0 0
        %487 = vmatpush1.bf16.msra.mxu0 0
        %488 = vmatprep.subr.bf16.mxu0 0
        %489 = vmatpush1.bf16.msra.mxu0 0
        %490 = vmatprep.subr.bf16.mxu0 0
        %491 = vmatpush1.bf16.msra.mxu0 0
        %492 = vmatprep.subr.bf16.mxu0 0
        %493 = vmatpush1.bf16.msra.mxu0 0
        %494 = vmatprep.subr.bf16.mxu0 0
        %495 = vmatpush1.bf16.msra.mxu0 0
        %496 = vmatprep.subr.bf16.mxu0 0
        %497 = vmatpush1.bf16.msra.mxu0 0
        %498 = vmatprep.subr.bf16.mxu0 0
        %499 = vmatpush1.bf16.msra.mxu0 0
        %500 = vmatprep.subr.bf16.mxu0 0
        %501 = vmatpush1.bf16.msra.mxu0 0
        %502 = vmatprep.subr.bf16.mxu0 0
        %503 = vmatpush1.bf16.msra.mxu0 0
        %504 = vmatprep.subr.bf16.mxu0 0
        %505 = vmatpush1.bf16.msra.mxu0 0
        %506 = vmatprep.subr.bf16.mxu0 0
        %507 = vmatpush1.bf16.msra.mxu0 0
        %508 = vmatprep.subr.bf16.mxu0 0
        %509 = vmatpush1.bf16.msra.mxu0 0
        %510 = vmatprep.mubr.bf16.mxu0 0
        %511 = vmatmul.mubr.bf16.gmra.mrb[0].mxu0 %v455
        %v512 = vpop.f32.mrb[0].mxu0
        %v513 = vadd.f32 0.0, %v512
        %v514 = vpop.f32.mrb[0].mxu0
        %v515 = vadd.f32 0.0, %v514
        %v516 = vpop.f32.mrb[0].mxu0
        %v517 = vadd.f32 0.0, %v516
        %v518 = vpop.f32.mrb[0].mxu0
        %v519 = vadd.f32 0.0, %v518
        %520 = vmatprep.mubr.bf16.mxu0 0
        %521 = vmatmul.mubr.bf16.gmra.mrb[0].mxu0 %v458
        %v522 = vpop.f32.mrb[0].mxu0
        %v523 = vadd.f32 0.0, %v522
        %v524 = vpop.f32.mrb[0].mxu0
        %v525 = vadd.f32 0.0, %v524
        %v526 = vpop.f32.mrb[0].mxu0
        %v527 = vadd.f32 0.0, %v526
        %v528 = vpop.f32.mrb[0].mxu0
        %v529 = vadd.f32 0.0, %v528
        %530 = vmatprep.mubr.bf16.mxu0 0
        %531 = vmatmul.mubr.bf16.gmra.mrb[0].mxu0 %v461
        %v532 = vpop.f32.mrb[0].mxu0
        %v533 = vadd.f32 0.0, %v532
        %v534 = vpop.f32.mrb[0].mxu0
        %v535 = vadd.f32 0.0, %v534
        %v536 = vpop.f32.mrb[0].mxu0
        %v537 = vadd.f32 0.0, %v536
        %v538 = vpop.f32.mrb[0].mxu0
        %v539 = vadd.f32 0.0, %v538
        %540 = vmatprep.mubr.bf16.mxu0 0
        %541 = vmatmul.mubr.bf16.gmra.mrb[0].mxu0 %v464
        %v542 = vpop.f32.mrb[0].mxu0
        %v543 = vadd.f32 0.0, %v542
        %v544 = vpop.f32.mrb[0].mxu0
        %v545 = vadd.f32 0.0, %v544
        %v546 = vpop.f32.mrb[0].mxu0
        %v547 = vadd.f32 0.0, %v546
        %v548 = vpop.f32.mrb[0].mxu0
        %v549 = vadd.f32 0.0, %v548
        %550 = vmatprep.mubr.bf16.mxu0 0
        %551 = vmatmul.mubr.bf16.gmra.mrb[0].mxu0 %v467
        %v552 = vpop.f32.mrb[0].mxu0
        %v553 = vadd.f32 0.0, %v552
        %v554 = vpop.f32.mrb[0].mxu0
        %v555 = vadd.f32 0.0, %v554
        %v556 = vpop.f32.mrb[0].mxu0
        %v557 = vadd.f32 0.0, %v556
        %v558 = vpop.f32.mrb[0].mxu0
        %v559 = vadd.f32 0.0, %v558
        %560 = vmatprep.mubr.bf16.mxu0 0
        %561 = vmatmul.mubr.bf16.gmra.mrb[0].mxu0 %v470
        %v562 = vpop.f32.mrb[0].mxu0
        %v563 = vadd.f32 0.0, %v562
        %v564 = vpop.f32.mrb[0].mxu0
        %v565 = vadd.f32 0.0, %v564
        %v566 = vpop.f32.mrb[0].mxu0
        %v567 = vadd.f32 0.0, %v566
        %v568 = vpop.f32.mrb[0].mxu0
        %v569 = vadd.f32 0.0, %v568
        %570 = vmatprep.mubr.bf16.mxu0 0
        %571 = vmatmul.mubr.bf16.gmra.mrb[0].mxu0 %v473
        %v572 = vpop.f32.mrb[0].mxu0
        %v573 = vadd.f32 0.0, %v572
        %v574 = vpop.f32.mrb[0].mxu0
        %v575 = vadd.f32 0.0, %v574
        %v576 = vpop.f32.mrb[0].mxu0
        %v577 = vadd.f32 0.0, %v576
        %v578 = vpop.f32.mrb[0].mxu0
        %v579 = vadd.f32 0.0, %v578
        %580 = vmatprep.mubr.bf16.mxu0 0
        %581 = vmatmul.mubr.bf16.gmra.mrb[0].mxu0 %v476
        %v582 = vpop.f32.mrb[0].mxu0
        %v583 = vadd.f32 0.0, %v582
        %v584 = vpop.f32.mrb[0].mxu0
        %v585 = vadd.f32 0.0, %v584
        %v586 = vpop.f32.mrb[0].mxu0
        %v587 = vadd.f32 0.0, %v586
        %v588 = vpop.f32.mrb[0].mxu0
        %v589 = vadd.f32 0.0, %v588
        %590 = vdwg.mxu0
        %v591 = vld [vmem:[#allocation2] sm:$0xff]
        %v592 = vld [vmem:[#allocation2 + $0x8] sm:$0xff]
        %v593 = vld [vmem:[#allocation2 + $0x10] sm:$0xff]
        %v594 = vld [vmem:[#allocation2 + $0x18] sm:$0xff]
        %v595 = vld [vmem:[#allocation2 + $0x20] sm:$0xff]
        %v596 = vld [vmem:[#allocation2 + $0x28] sm:$0xff]
        %v597 = vld [vmem:[#allocation2 + $0x30] sm:$0xff]
        %v598 = vld [vmem:[#allocation2 + $0x38] sm:$0xff]
        %v599 = vld [vmem:[#allocation2 + $0x40] sm:$0xff]
        %v600 = vld [vmem:[#allocation2 + $0x48] sm:$0xff]
        %v601 = vld [vmem:[#allocation2 + $0x50] sm:$0xff]
        %v602 = vld [vmem:[#allocation2 + $0x58] sm:$0xff]
        %v603 = vld [vmem:[#allocation2 + $0x60] sm:$0xff]
        %v604 = vld [vmem:[#allocation2 + $0x68] sm:$0xff]
        %v605 = vld [vmem:[#allocation2 + $0x70] sm:$0xff]
        %v606 = vld [vmem:[#allocation2 + $0x78] sm:$0xff]
        %s607 = sld [smem:[#allocation4 + %s32]]
        %v608 = vstv %s607
        %v609 = vmul.f32 %v608, %v513
        %v610 = vmul.f32 %v608, %v517
        %v611 = vmul.f32 %v608, %v523
        %v612 = vmul.f32 %v608, %v527
        %v613 = vmul.f32 %v608, %v533
        %v614 = vmul.f32 %v608, %v537
        %v615 = vmul.f32 %v608, %v543
        %v616 = vmul.f32 %v608, %v547
        %v617 = vmul.f32 %v608, %v553
        %v618 = vmul.f32 %v608, %v557
        %v619 = vmul.f32 %v608, %v563
        %v620 = vmul.f32 %v608, %v567
        %v621 = vmul.f32 %v608, %v573
        %v622 = vmul.f32 %v608, %v577
        %v623 = vmul.f32 %v608, %v583
        %v624 = vmul.f32 %v608, %v587
        %v625 = vadd.f32 %v591, %v609
        %v626 = vadd.f32 %v592, %v610
        %v627 = vadd.f32 %v593, %v611
        %v628 = vadd.f32 %v594, %v612
        %v629 = vadd.f32 %v595, %v613
        %v630 = vadd.f32 %v596, %v614
        %v631 = vadd.f32 %v597, %v615
        %v632 = vadd.f32 %v598, %v616
        %v633 = vadd.f32 %v599, %v617
        %v634 = vadd.f32 %v600, %v618
        %v635 = vadd.f32 %v601, %v619
        %v636 = vadd.f32 %v602, %v620
        %v637 = vadd.f32 %v603, %v621
        %v638 = vadd.f32 %v604, %v622
        %v639 = vadd.f32 %v605, %v623
        %v640 = vadd.f32 %v606, %v624
        %641 = vst [vmem:[#allocation2] sm:$0xff] %v625
        %642 = vst [vmem:[#allocation2 + $0x8] sm:$0xff] %v626
        %643 = vst [vmem:[#allocation2 + $0x10] sm:$0xff] %v627
        %644 = vst [vmem:[#allocation2 + $0x18] sm:$0xff] %v628
        %645 = vst [vmem:[#allocation2 + $0x20] sm:$0xff] %v629
        %646 = vst [vmem:[#allocation2 + $0x28] sm:$0xff] %v630
        %647 = vst [vmem:[#allocation2 + $0x30] sm:$0xff] %v631
        %648 = vst [vmem:[#allocation2 + $0x38] sm:$0xff] %v632
        %649 = vst [vmem:[#allocation2 + $0x40] sm:$0xff] %v633
        %650 = vst [vmem:[#allocation2 + $0x48] sm:$0xff] %v634
        %651 = vst [vmem:[#allocation2 + $0x50] sm:$0xff] %v635
        %652 = vst [vmem:[#allocation2 + $0x58] sm:$0xff] %v636
        %653 = vst [vmem:[#allocation2 + $0x60] sm:$0xff] %v637
        %654 = vst [vmem:[#allocation2 + $0x68] sm:$0xff] %v638
        %655 = vst [vmem:[#allocation2 + $0x70] sm:$0xff] %v639
        %656 = vst [vmem:[#allocation2 + $0x78] sm:$0xff] %v640
        %v657 = vld [vmem:[#allocation3] sm:$0xff]
        %v658 = vld [vmem:[#allocation3 + $0x8] sm:$0xff]
        %v659 = vld [vmem:[#allocation3 + $0x10] sm:$0xff]
        %v660 = vld [vmem:[#allocation3 + $0x18] sm:$0xff]
        %v661 = vld [vmem:[#allocation3 + $0x20] sm:$0xff]
        %v662 = vld [vmem:[#allocation3 + $0x28] sm:$0xff]
        %v663 = vld [vmem:[#allocation3 + $0x30] sm:$0xff]
        %v664 = vld [vmem:[#allocation3 + $0x38] sm:$0xff]
        %v665 = vld [vmem:[#allocation3 + $0x40] sm:$0xff]
        %v666 = vld [vmem:[#allocation3 + $0x48] sm:$0xff]
        %v667 = vld [vmem:[#allocation3 + $0x50] sm:$0xff]
        %v668 = vld [vmem:[#allocation3 + $0x58] sm:$0xff]
        %v669 = vld [vmem:[#allocation3 + $0x60] sm:$0xff]
        %v670 = vld [vmem:[#allocation3 + $0x68] sm:$0xff]
        %v671 = vld [vmem:[#allocation3 + $0x70] sm:$0xff]
        %v672 = vld [vmem:[#allocation3 + $0x78] sm:$0xff]
        %s673 = sld [smem:[#allocation7 + %s32]]
        %v674 = vstv %s673
        %v675 = vmul.f32 %v674, %v515
        %v676 = vmul.f32 %v674, %v519
        %v677 = vmul.f32 %v674, %v525
        %v678 = vmul.f32 %v674, %v529
        %v679 = vmul.f32 %v674, %v535
        %v680 = vmul.f32 %v674, %v539
        %v681 = vmul.f32 %v674, %v545
        %v682 = vmul.f32 %v674, %v549
        %v683 = vmul.f32 %v674, %v555
        %v684 = vmul.f32 %v674, %v559
        %v685 = vmul.f32 %v674, %v565
        %v686 = vmul.f32 %v674, %v569
        %v687 = vmul.f32 %v674, %v575
        %v688 = vmul.f32 %v674, %v579
        %v689 = vmul.f32 %v674, %v585
        %v690 = vmul.f32 %v674, %v589
        %v691 = vadd.f32 %v657, %v675
        %v692 = vadd.f32 %v658, %v676
        %v693 = vadd.f32 %v659, %v677
        %v694 = vadd.f32 %v660, %v678
        %v695 = vadd.f32 %v661, %v679
        %v696 = vadd.f32 %v662, %v680
        %v697 = vadd.f32 %v663, %v681
        %v698 = vadd.f32 %v664, %v682
        %v699 = vadd.f32 %v665, %v683
        %v700 = vadd.f32 %v666, %v684
        %v701 = vadd.f32 %v667, %v685
        %v702 = vadd.f32 %v668, %v686
        %v703 = vadd.f32 %v669, %v687
        %v704 = vadd.f32 %v670, %v688
        %v705 = vadd.f32 %v671, %v689
        %v706 = vadd.f32 %v672, %v690
        %707 = vst [vmem:[#allocation3] sm:$0xff] %v691
        %708 = vst [vmem:[#allocation3 + $0x8] sm:$0xff] %v692
        %709 = vst [vmem:[#allocation3 + $0x10] sm:$0xff] %v693
        %710 = vst [vmem:[#allocation3 + $0x18] sm:$0xff] %v694
        %711 = vst [vmem:[#allocation3 + $0x20] sm:$0xff] %v695
        %712 = vst [vmem:[#allocation3 + $0x28] sm:$0xff] %v696
        %713 = vst [vmem:[#allocation3 + $0x30] sm:$0xff] %v697
        %714 = vst [vmem:[#allocation3 + $0x38] sm:$0xff] %v698
        %715 = vst [vmem:[#allocation3 + $0x40] sm:$0xff] %v699
        %716 = vst [vmem:[#allocation3 + $0x48] sm:$0xff] %v700
        %717 = vst [vmem:[#allocation3 + $0x50] sm:$0xff] %v701
        %718 = vst [vmem:[#allocation3 + $0x58] sm:$0xff] %v702
        %719 = vst [vmem:[#allocation3 + $0x60] sm:$0xff] %v703
        %720 = vst [vmem:[#allocation3 + $0x68] sm:$0xff] %v704
        %721 = vst [vmem:[#allocation3 + $0x70] sm:$0xff] %v705
        %722 = vst [vmem:[#allocation3 + $0x78] sm:$0xff] %v706
        %p723 = scmp.eq.s32.totalorder %s32, 3
        // Predicated region
        $region53: #{tpu_custom_call.1} parent=39 // pred_check
          %p724 = pneg %p723
        $region54: #{tpu_custom_call.1} parent=39 // pred_check_branch
          %726 = sbr.rel (%p724) target = $region56
        $region55: #{tpu_custom_call.1} parent=39 // pred_region
          %v727 = vld [vmem:[#allocation2] sm:$0xff]
          %v728 = vld [vmem:[#allocation2 + $0x8] sm:$0xff]
          %v729 = vld [vmem:[#allocation2 + $0x10] sm:$0xff]
          %v730 = vld [vmem:[#allocation2 + $0x18] sm:$0xff]
          %v731 = vld [vmem:[#allocation2 + $0x20] sm:$0xff]
          %v732 = vld [vmem:[#allocation2 + $0x28] sm:$0xff]
          %v733 = vld [vmem:[#allocation2 + $0x30] sm:$0xff]
          %v734 = vld [vmem:[#allocation2 + $0x38] sm:$0xff]
          %v735 = vld [vmem:[#allocation2 + $0x40] sm:$0xff]
          %v736 = vld [vmem:[#allocation2 + $0x48] sm:$0xff]
          %v737 = vld [vmem:[#allocation2 + $0x50] sm:$0xff]
          %v738 = vld [vmem:[#allocation2 + $0x58] sm:$0xff]
          %v739 = vld [vmem:[#allocation2 + $0x60] sm:$0xff]
          %v740 = vld [vmem:[#allocation2 + $0x68] sm:$0xff]
          %v741 = vld [vmem:[#allocation2 + $0x70] sm:$0xff]
          %v742 = vld [vmem:[#allocation2 + $0x78] sm:$0xff]
          %v743 = vpack.c.bf16 %v728, %v727
          %v744 = vpack.c.bf16 %v730, %v729
          %v745 = vpack.c.bf16 %v732, %v731
          %v746 = vpack.c.bf16 %v734, %v733
          %v747 = vpack.c.bf16 %v736, %v735
          %v748 = vpack.c.bf16 %v738, %v737
          %v749 = vpack.c.bf16 %v740, %v739
          %v750 = vpack.c.bf16 %v742, %v741
          %v759 = vunpack.c.l.b16 %v743
          %v760 = vunpack.c.h.b16 %v743
          %v761 = vunpack.c.l.b16 %v744
          %v762 = vunpack.c.h.b16 %v744
          %v763 = vunpack.c.l.b16 %v745
          %v764 = vunpack.c.h.b16 %v745
          %v765 = vunpack.c.l.b16 %v746
          %v766 = vunpack.c.h.b16 %v746
          %v767 = vunpack.c.l.b16 %v747
          %v768 = vunpack.c.h.b16 %v747
          %v769 = vunpack.c.l.b16 %v748
          %v770 = vunpack.c.h.b16 %v748
          %v771 = vunpack.c.l.b16 %v749
          %v772 = vunpack.c.h.b16 %v749
          %v773 = vunpack.c.l.b16 %v750
          %v774 = vunpack.c.h.b16 %v750
          %v775 = vpack.c.b16 %v759, %v759
          %v776 = vpack.c.b16 %v760, %v760
          %v777 = vpack.c.b16 %v761, %v761
          %v778 = vpack.c.b16 %v762, %v762
          %v779 = vpack.c.b16 %v763, %v763
          %v780 = vpack.c.b16 %v764, %v764
          %v781 = vpack.c.b16 %v765, %v765
          %v782 = vpack.c.b16 %v766, %v766
          %v783 = vpack.c.b16 %v767, %v767
          %v784 = vpack.c.b16 %v768, %v768
          %v785 = vpack.c.b16 %v769, %v769
          %v786 = vpack.c.b16 %v770, %v770
          %v787 = vpack.c.b16 %v771, %v771
          %v788 = vpack.c.b16 %v772, %v772
          %v789 = vpack.c.b16 %v773, %v773
          %v790 = vpack.c.b16 %v774, %v774
          %807 = vst [vmem:[%s339] sm:$0xf] %v775
          %808 = vst [vmem:[%s339 + $0x4] sm:$0xf] %v776
          %809 = vst [vmem:[%s339 + $0x8] sm:$0xf] %v777
          %810 = vst [vmem:[%s339 + $0xc] sm:$0xf] %v778
          %811 = vst [vmem:[%s339 + $0x10] sm:$0xf] %v779
          %812 = vst [vmem:[%s339 + $0x14] sm:$0xf] %v780
          %813 = vst [vmem:[%s339 + $0x18] sm:$0xf] %v781
          %814 = vst [vmem:[%s339 + $0x1c] sm:$0xf] %v782
          %815 = vst [vmem:[%s339 + $0x20] sm:$0xf] %v783
          %816 = vst [vmem:[%s339 + $0x24] sm:$0xf] %v784
          %817 = vst [vmem:[%s339 + $0x28] sm:$0xf] %v785
          %818 = vst [vmem:[%s339 + $0x2c] sm:$0xf] %v786
          %819 = vst [vmem:[%s339 + $0x30] sm:$0xf] %v787
          %820 = vst [vmem:[%s339 + $0x34] sm:$0xf] %v788
          %821 = vst [vmem:[%s339 + $0x38] sm:$0xf] %v789
          %822 = vst [vmem:[%s339 + $0x3c] sm:$0xf] %v790
          %v823 = vld [vmem:[#allocation3] sm:$0xff]
          %v824 = vld [vmem:[#allocation3 + $0x8] sm:$0xff]
          %v825 = vld [vmem:[#allocation3 + $0x10] sm:$0xff]
          %v826 = vld [vmem:[#allocation3 + $0x18] sm:$0xff]
          %v827 = vld [vmem:[#allocation3 + $0x20] sm:$0xff]
          %v828 = vld [vmem:[#allocation3 + $0x28] sm:$0xff]
          %v829 = vld [vmem:[#allocation3 + $0x30] sm:$0xff]
          %v830 = vld [vmem:[#allocation3 + $0x38] sm:$0xff]
          %v831 = vld [vmem:[#allocation3 + $0x40] sm:$0xff]
          %v832 = vld [vmem:[#allocation3 + $0x48] sm:$0xff]
          %v833 = vld [vmem:[#allocation3 + $0x50] sm:$0xff]
          %v834 = vld [vmem:[#allocation3 + $0x58] sm:$0xff]
          %v835 = vld [vmem:[#allocation3 + $0x60] sm:$0xff]
          %v836 = vld [vmem:[#allocation3 + $0x68] sm:$0xff]
          %v837 = vld [vmem:[#allocation3 + $0x70] sm:$0xff]
          %v838 = vld [vmem:[#allocation3 + $0x78] sm:$0xff]
          %v839 = vld [vmem:[%s367] sm:$0xff]
          %v840 = vld [vmem:[%s367 + $0x8] sm:$0xff]
          %v841 = vld [vmem:[%s367 + $0x10] sm:$0xff]
          %v842 = vld [vmem:[%s367 + $0x18] sm:$0xff]
          %v843 = vld [vmem:[%s367 + $0x20] sm:$0xff]
          %v844 = vld [vmem:[%s367 + $0x28] sm:$0xff]
          %v845 = vld [vmem:[%s367 + $0x30] sm:$0xff]
          %v846 = vld [vmem:[%s367 + $0x38] sm:$0xff]
          %v847 = vld [vmem:[%s367 + $0x40] sm:$0xff]
          %v848 = vld [vmem:[%s367 + $0x48] sm:$0xff]
          %v849 = vld [vmem:[%s367 + $0x50] sm:$0xff]
          %v850 = vld [vmem:[%s367 + $0x58] sm:$0xff]
          %v851 = vld [vmem:[%s367 + $0x60] sm:$0xff]
          %v852 = vld [vmem:[%s367 + $0x68] sm:$0xff]
          %v853 = vld [vmem:[%s367 + $0x70] sm:$0xff]
          %v854 = vld [vmem:[%s367 + $0x78] sm:$0xff]
          %856 = vset.pattern.permute.xlu0 0
          %857 = vperm.xlu0 %856, %v839
          %v858 = vpop.permute.xlu0 %857
          %861 = vset.pattern.permute.xlu0 0
          %862 = vperm.xlu0 %861, %v840
          %v863 = vpop.permute.xlu0 %862
          %866 = vset.pattern.permute.xlu0 0
          %867 = vperm.xlu0 %866, %v841
          %v868 = vpop.permute.xlu0 %867
          %871 = vset.pattern.permute.xlu0 0
          %872 = vperm.xlu0 %871, %v842
          %v873 = vpop.permute.xlu0 %872
          %876 = vset.pattern.permute.xlu0 0
          %877 = vperm.xlu0 %876, %v843
          %v878 = vpop.permute.xlu0 %877
          %881 = vset.pattern.permute.xlu0 0
          %882 = vperm.xlu0 %881, %v844
          %v883 = vpop.permute.xlu0 %882
          %886 = vset.pattern.permute.xlu0 0
          %887 = vperm.xlu0 %886, %v845
          %v888 = vpop.permute.xlu0 %887
          %891 = vset.pattern.permute.xlu0 0
          %892 = vperm.xlu0 %891, %v846
          %v893 = vpop.permute.xlu0 %892
          %896 = vset.pattern.permute.xlu0 0
          %897 = vperm.xlu0 %896, %v847
          %v898 = vpop.permute.xlu0 %897
          %901 = vset.pattern.permute.xlu0 0
          %902 = vperm.xlu0 %901, %v848
          %v903 = vpop.permute.xlu0 %902
          %906 = vset.pattern.permute.xlu0 0
          %907 = vperm.xlu0 %906, %v849
          %v908 = vpop.permute.xlu0 %907
          %911 = vset.pattern.permute.xlu0 0
          %912 = vperm.xlu0 %911, %v850
          %v913 = vpop.permute.xlu0 %912
          %916 = vset.pattern.permute.xlu0 0
          %917 = vperm.xlu0 %916, %v851
          %v918 = vpop.permute.xlu0 %917
          %921 = vset.pattern.permute.xlu0 0
          %922 = vperm.xlu0 %921, %v852
          %v923 = vpop.permute.xlu0 %922
          %926 = vset.pattern.permute.xlu0 0
          %927 = vperm.xlu0 %926, %v853
          %v928 = vpop.permute.xlu0 %927
          %931 = vset.pattern.permute.xlu0 0
          %932 = vperm.xlu0 %931, %v854
          %v933 = vpop.permute.xlu0 %932
          %v935 = vadd.f32 %v823, %v858
          %v936 = vadd.f32 %v824, %v863
          %v937 = vadd.f32 %v825, %v868
          %v938 = vadd.f32 %v826, %v873
          %v939 = vadd.f32 %v827, %v878
          %v940 = vadd.f32 %v828, %v883
          %v941 = vadd.f32 %v829, %v888
          %v942 = vadd.f32 %v830, %v893
          %v943 = vadd.f32 %v831, %v898
          %v944 = vadd.f32 %v832, %v903
          %v945 = vadd.f32 %v833, %v908
          %v946 = vadd.f32 %v834, %v913
          %v947 = vadd.f32 %v835, %v918
          %v948 = vadd.f32 %v836, %v923
          %v949 = vadd.f32 %v837, %v928
          %v950 = vadd.f32 %v838, %v933
          %v951 = vpack.c.bf16 %v936, %v935
          %v952 = vpack.c.bf16 %v938, %v937
          %v953 = vpack.c.bf16 %v940, %v939
          %v954 = vpack.c.bf16 %v942, %v941
          %v955 = vpack.c.bf16 %v944, %v943
          %v956 = vpack.c.bf16 %v946, %v945
          %v957 = vpack.c.bf16 %v948, %v947
          %v958 = vpack.c.bf16 %v950, %v949
          %v967 = vunpack.c.l.b16 %v951
          %v968 = vunpack.c.h.b16 %v951
          %v969 = vunpack.c.l.b16 %v952
          %v970 = vunpack.c.h.b16 %v952
          %v971 = vunpack.c.l.b16 %v953
          %v972 = vunpack.c.h.b16 %v953
          %v973 = vunpack.c.l.b16 %v954
          %v974 = vunpack.c.h.b16 %v954
          %v975 = vunpack.c.l.b16 %v955
          %v976 = vunpack.c.h.b16 %v955
          %v977 = vunpack.c.l.b16 %v956
          %v978 = vunpack.c.h.b16 %v956
          %v979 = vunpack.c.l.b16 %v957
          %v980 = vunpack.c.h.b16 %v957
          %v981 = vunpack.c.l.b16 %v958
          %v982 = vunpack.c.h.b16 %v958
          %v983 = vpack.c.b16 %v967, %v967
          %v984 = vpack.c.b16 %v968, %v968
          %v985 = vpack.c.b16 %v969, %v969
          %v986 = vpack.c.b16 %v970, %v970
          %v987 = vpack.c.b16 %v971, %v971
          %v988 = vpack.c.b16 %v972, %v972
          %v989 = vpack.c.b16 %v973, %v973
          %v990 = vpack.c.b16 %v974, %v974
          %v991 = vpack.c.b16 %v975, %v975
          %v992 = vpack.c.b16 %v976, %v976
          %v993 = vpack.c.b16 %v977, %v977
          %v994 = vpack.c.b16 %v978, %v978
          %v995 = vpack.c.b16 %v979, %v979
          %v996 = vpack.c.b16 %v980, %v980
          %v997 = vpack.c.b16 %v981, %v981
          %v998 = vpack.c.b16 %v982, %v982
          %1015 = vst [vmem:[%s353] sm:$0xf] %v983
          %1016 = vst [vmem:[%s353 + $0x4] sm:$0xf] %v984
          %1017 = vst [vmem:[%s353 + $0x8] sm:$0xf] %v985
          %1018 = vst [vmem:[%s353 + $0xc] sm:$0xf] %v986
          %1019 = vst [vmem:[%s353 + $0x10] sm:$0xf] %v987
          %1020 = vst [vmem:[%s353 + $0x14] sm:$0xf] %v988
          %1021 = vst [vmem:[%s353 + $0x18] sm:$0xf] %v989
          %1022 = vst [vmem:[%s353 + $0x1c] sm:$0xf] %v990
          %1023 = vst [vmem:[%s353 + $0x20] sm:$0xf] %v991
          %1024 = vst [vmem:[%s353 + $0x24] sm:$0xf] %v992
          %1025 = vst [vmem:[%s353 + $0x28] sm:$0xf] %v993
          %1026 = vst [vmem:[%s353 + $0x2c] sm:$0xf] %v994
          %1027 = vst [vmem:[%s353 + $0x30] sm:$0xf] %v995
          %1028 = vst [vmem:[%s353 + $0x34] sm:$0xf] %v996
          %1029 = vst [vmem:[%s353 + $0x38] sm:$0xf] %v997
          %1030 = vst [vmem:[%s353 + $0x3c] sm:$0xf] %v998
          %v1031 = vmul.f32 %v727, %v727
          %v1032 = vmul.f32 %v728, %v728
          %v1033 = vmul.f32 %v729, %v729
          %v1034 = vmul.f32 %v730, %v730
          %v1035 = vmul.f32 %v731, %v731
          %v1036 = vmul.f32 %v732, %v732
          %v1037 = vmul.f32 %v733, %v733
          %v1038 = vmul.f32 %v734, %v734
          %v1039 = vmul.f32 %v735, %v735
          %v1040 = vmul.f32 %v736, %v736
          %v1041 = vmul.f32 %v737, %v737
          %v1042 = vmul.f32 %v738, %v738
          %v1043 = vmul.f32 %v739, %v739
          %v1044 = vmul.f32 %v740, %v740
          %v1045 = vmul.f32 %v741, %v741
          %v1046 = vmul.f32 %v742, %v742
          %1047 = vmatprep.subr.mxu0 0.0
          %1048 = vmatpush1.xpose.msra.mxu0 %v727
          %1049 = vmatprep.subr.mxu0 0.0
          %1050 = vmatpush1.xpose.msra.mxu0 %v728
          %1051 = vmatprep.subr.mxu0 0.0
          %1052 = vmatpush1.xpose.msra.mxu0 %v729
          %1053 = vmatprep.subr.mxu0 0.0
          %1054 = vmatpush1.xpose.msra.mxu0 %v730
          %1055 = vmatprep.subr.mxu0 0.0
          %1056 = vmatpush1.xpose.msra.mxu0 %v731
          %1057 = vmatprep.subr.mxu0 0.0
          %1058 = vmatpush1.xpose.msra.mxu0 %v732
          %1059 = vmatprep.subr.mxu0 0.0
          %1060 = vmatpush1.xpose.msra.mxu0 %v733
          %1061 = vmatprep.subr.mxu0 0.0
          %1062 = vmatpush1.xpose.msra.mxu0 %v734
          %1063 = vmatprep.subr.mxu0 0.0
          %1064 = vmatpush1.xpose.msra.mxu0 %v735
          %1065 = vmatprep.subr.mxu0 0.0
          %1066 = vmatpush1.xpose.msra.mxu0 %v736
          %1067 = vmatprep.subr.mxu0 0.0
          %1068 = vmatpush1.xpose.msra.mxu0 %v737
          %1069 = vmatprep.subr.mxu0 0.0
          %1070 = vmatpush1.xpose.msra.mxu0 %v738
          %1071 = vmatprep.subr.mxu0 0.0
          %1072 = vmatpush1.xpose.msra.mxu0 %v739
          %1073 = vmatprep.subr.mxu0 0.0
          %1074 = vmatpush1.xpose.msra.mxu0 %v740
          %1075 = vmatprep.subr.mxu0 0.0
          %1076 = vmatpush1.xpose.msra.mxu0 %v741
          %1077 = vmatprep.subr.mxu0 0.0
          %1078 = vmatpush1.xpose.msra.mxu0 %v742
          %1079 = vmatprep.subr.mxu0 0.0
          %1080 = vmatpush1.xpose.msra.mxu0 0.0
          %1081 = vmatprep.subr.mxu0 0.0
          %1082 = vmatpush1.xpose.msra.mxu0 0.0
          %1083 = vmatprep.subr.mxu0 0.0
          %1084 = vmatpush1.xpose.msra.mxu0 0.0
          %1085 = vmatprep.subr.mxu0 0.0
          %1086 = vmatpush1.xpose.msra.mxu0 0.0
          %1087 = vmatprep.subr.mxu0 0.0
          %1088 = vmatpush1.xpose.msra.mxu0 0.0
          %1089 = vmatprep.subr.mxu0 0.0
          %1090 = vmatpush1.xpose.msra.mxu0 0.0
          %1091 = vmatprep.subr.mxu0 0.0
          %1092 = vmatpush1.xpose.msra.mxu0 0.0
          %1093 = vmatprep.subr.mxu0 0.0
          %1094 = vmatpush1.xpose.msra.mxu0 0.0
          %1095 = vmatprep.subr.mxu0 0.0
          %1096 = vmatpush1.xpose.msra.mxu0 0.0
          %1097 = vmatprep.subr.mxu0 0.0
          %1098 = vmatpush1.xpose.msra.mxu0 0.0
          %1099 = vmatprep.subr.mxu0 0.0
          %1100 = vmatpush1.xpose.msra.mxu0 0.0
          %1101 = vmatprep.subr.mxu0 0.0
          %1102 = vmatpush1.xpose.msra.mxu0 0.0
          %1103 = vmatprep.subr.mxu0 0.0
          %1104 = vmatpush1.xpose.msra.mxu0 0.0
          %1105 = vmatprep.subr.mxu0 0.0
          %1106 = vmatpush1.xpose.msra.mxu0 0.0
          %1107 = vmatprep.subr.mxu0 0.0
          %1108 = vmatpush1.xpose.msra.mxu0 0.0
          %1109 = vmatprep.subr.mxu0 0.0
          %1110 = vmatpush1.xpose.msra.mxu0 0.0
          %1111 = vmatprep.mubr.f32.mxu0 0.0
          %1112 = vmatmul.mubr.f32.gmra.mrb[0].mxu0 %v727
          %v1113 = vpop.f32.mrb[0].mxu0
          %v1114 = vadd.f32 0.0, %v1113
          %v1115 = vpop.f32.mrb[0].mxu0
          %1116 = vmatprep.mubr.f32.mxu0 0.0
          %1117 = vmatmul.mubr.f32.gmra.mrb[0].mxu0 %v728
          %v1118 = vpop.f32.mrb[0].mxu0
          %v1119 = vadd.f32 0.0, %v1118
          %v1120 = vpop.f32.mrb[0].mxu0
          %1121 = vmatprep.mubr.f32.mxu0 0.0
          %1122 = vmatmul.mubr.f32.gmra.mrb[0].mxu0 %v729
          %v1123 = vpop.f32.mrb[0].mxu0
          %v1124 = vadd.f32 0.0, %v1123
          %v1125 = vpop.f32.mrb[0].mxu0
          %1126 = vmatprep.mubr.f32.mxu0 0.0
          %1127 = vmatmul.mubr.f32.gmra.mrb[0].mxu0 %v730
          %v1128 = vpop.f32.mrb[0].mxu0
          %v1129 = vadd.f32 0.0, %v1128
          %v1130 = vpop.f32.mrb[0].mxu0
          %1131 = vmatprep.mubr.f32.mxu0 0.0
          %1132 = vmatmul.mubr.f32.gmra.mrb[0].mxu0 %v731
          %v1133 = vpop.f32.mrb[0].mxu0
          %v1134 = vadd.f32 0.0, %v1133
          %v1135 = vpop.f32.mrb[0].mxu0
          %1136 = vmatprep.mubr.f32.mxu0 0.0
          %1137 = vmatmul.mubr.f32.gmra.mrb[0].mxu0 %v732
          %v1138 = vpop.f32.mrb[0].mxu0
          %v1139 = vadd.f32 0.0, %v1138
          %v1140 = vpop.f32.mrb[0].mxu0
          %1141 = vmatprep.mubr.f32.mxu0 0.0
          %1142 = vmatmul.mubr.f32.gmra.mrb[0].mxu0 %v733
          %v1143 = vpop.f32.mrb[0].mxu0
          %v1144 = vadd.f32 0.0, %v1143
          %v1145 = vpop.f32.mrb[0].mxu0
          %1146 = vmatprep.mubr.f32.mxu0 0.0
          %1147 = vmatmul.mubr.f32.gmra.mrb[0].mxu0 %v734
          %v1148 = vpop.f32.mrb[0].mxu0
          %v1149 = vadd.f32 0.0, %v1148
          %v1150 = vpop.f32.mrb[0].mxu0
          %1151 = vmatprep.mubr.f32.mxu0 0.0
          %1152 = vmatmul.mubr.f32.gmra.mrb[0].mxu0 %v735
          %v1153 = vpop.f32.mrb[0].mxu0
          %v1154 = vadd.f32 0.0, %v1153
          %v1155 = vpop.f32.mrb[0].mxu0
          %1156 = vmatprep.mubr.f32.mxu0 0.0
          %1157 = vmatmul.mubr.f32.gmra.mrb[0].mxu0 %v736
          %v1158 = vpop.f32.mrb[0].mxu0
          %v1159 = vadd.f32 0.0, %v1158
          %v1160 = vpop.f32.mrb[0].mxu0
          %1161 = vmatprep.mubr.f32.mxu0 0.0
          %1162 = vmatmul.mubr.f32.gmra.mrb[0].mxu0 %v737
          %v1163 = vpop.f32.mrb[0].mxu0
          %v1164 = vadd.f32 0.0, %v1163
          %v1165 = vpop.f32.mrb[0].mxu0
          %1166 = vmatprep.mubr.f32.mxu0 0.0
          %1167 = vmatmul.mubr.f32.gmra.mrb[0].mxu0 %v738
          %v1168 = vpop.f32.mrb[0].mxu0
          %v1169 = vadd.f32 0.0, %v1168
          %v1170 = vpop.f32.mrb[0].mxu0
          %1171 = vmatprep.mubr.f32.mxu0 0.0
          %1172 = vmatmul.mubr.f32.gmra.mrb[0].mxu0 %v739
          %v1173 = vpop.f32.mrb[0].mxu0
          %v1174 = vadd.f32 0.0, %v1173
          %v1175 = vpop.f32.mrb[0].mxu0
          %1176 = vmatprep.mubr.f32.mxu0 0.0
          %1177 = vmatmul.mubr.f32.gmra.mrb[0].mxu0 %v740
          %v1178 = vpop.f32.mrb[0].mxu0
          %v1179 = vadd.f32 0.0, %v1178
          %v1180 = vpop.f32.mrb[0].mxu0
          %1181 = vmatprep.mubr.f32.mxu0 0.0
          %1182 = vmatmul.mubr.f32.gmra.mrb[0].mxu0 %v741
          %v1183 = vpop.f32.mrb[0].mxu0
          %v1184 = vadd.f32 0.0, %v1183
          %v1185 = vpop.f32.mrb[0].mxu0
          %1186 = vmatprep.mubr.f32.mxu0 0.0
          %1187 = vmatmul.mubr.f32.gmra.mrb[0].mxu0 %v742
          %v1188 = vpop.f32.mrb[0].mxu0
          %v1189 = vadd.f32 0.0, %v1188
          %v1190 = vpop.f32.mrb[0].mxu0
          %1191 = vdwg.mxu0
          %1192 = vadd.xlane.f32.xlu0 %v1031
          %v1193 = vpop.xlane.xlu0 %1192
          %1194 = vadd.xlane.f32.xlu0 %v1032
          %v1195 = vpop.xlane.xlu0 %1194
          %1196 = vadd.xlane.f32.xlu0 %v1033
          %v1197 = vpop.xlane.xlu0 %1196
          %1198 = vadd.xlane.f32.xlu0 %v1034
          %v1199 = vpop.xlane.xlu0 %1198
          %1200 = vadd.xlane.f32.xlu0 %v1035
          %v1201 = vpop.xlane.xlu0 %1200
          %1202 = vadd.xlane.f32.xlu0 %v1036
          %v1203 = vpop.xlane.xlu0 %1202
          %1204 = vadd.xlane.f32.xlu0 %v1037
          %v1205 = vpop.xlane.xlu0 %1204
          %1206 = vadd.xlane.f32.xlu0 %v1038
          %v1207 = vpop.xlane.xlu0 %1206
          %1208 = vadd.xlane.f32.xlu0 %v1039
          %v1209 = vpop.xlane.xlu0 %1208
          %1210 = vadd.xlane.f32.xlu0 %v1040
          %v1211 = vpop.xlane.xlu0 %1210
          %1212 = vadd.xlane.f32.xlu0 %v1041
          %v1213 = vpop.xlane.xlu0 %1212
          %1214 = vadd.xlane.f32.xlu0 %v1042
          %v1215 = vpop.xlane.xlu0 %1214
          %1216 = vadd.xlane.f32.xlu0 %v1043
          %v1217 = vpop.xlane.xlu0 %1216
          %1218 = vadd.xlane.f32.xlu0 %v1044
          %v1219 = vpop.xlane.xlu0 %1218
          %1220 = vadd.xlane.f32.xlu0 %v1045
          %v1221 = vpop.xlane.xlu0 %1220
          %1222 = vadd.xlane.f32.xlu0 %v1046
          %v1223 = vpop.xlane.xlu0 %1222
          %1224 = vmatprep.subr.mxu0 0.0
          %1225 = vmatpush1.xpose.msra.mxu0 %v1031
          %1226 = vmatprep.subr.mxu0 0.0
          %1227 = vmatpush1.xpose.msra.mxu0 %v1032
          %1228 = vmatprep.subr.mxu0 0.0
          %1229 = vmatpush1.xpose.msra.mxu0 %v1033
          %1230 = vmatprep.subr.mxu0 0.0
          %1231 = vmatpush1.xpose.msra.mxu0 %v1034
          %1232 = vmatprep.subr.mxu0 0.0
          %1233 = vmatpush1.xpose.msra.mxu0 %v1035
          %1234 = vmatprep.subr.mxu0 0.0
          %1235 = vmatpush1.xpose.msra.mxu0 %v1036
          %1236 = vmatprep.subr.mxu0 0.0
          %1237 = vmatpush1.xpose.msra.mxu0 %v1037
          %1238 = vmatprep.subr.mxu0 0.0
          %1239 = vmatpush1.xpose.msra.mxu0 %v1038
          %1240 = vmatprep.subr.mxu0 0.0
          %1241 = vmatpush1.xpose.msra.mxu0 %v1039
          %1242 = vmatprep.subr.mxu0 0.0
          %1243 = vmatpush1.xpose.msra.mxu0 %v1040
          %1244 = vmatprep.subr.mxu0 0.0
          %1245 = vmatpush1.xpose.msra.mxu0 %v1041
          %1246 = vmatprep.subr.mxu0 0.0
          %1247 = vmatpush1.xpose.msra.mxu0 %v1042
          %1248 = vmatprep.subr.mxu0 0.0
          %1249 = vmatpush1.xpose.msra.mxu0 %v1043
          %1250 = vmatprep.subr.mxu0 0.0
          %1251 = vmatpush1.xpose.msra.mxu0 %v1044
          %1252 = vmatprep.subr.mxu0 0.0
          %1253 = vmatpush1.xpose.msra.mxu0 %v1045
          %1254 = vmatprep.subr.mxu0 0.0
          %1255 = vmatpush1.xpose.msra.mxu0 %v1046
          %1256 = vmatprep.subr.mxu0 0.0
          %1257 = vmatpush1.xpose.msra.mxu0 0.0
          %1258 = vmatprep.subr.mxu0 0.0
          %1259 = vmatpush1.xpose.msra.mxu0 0.0
          %1260 = vmatprep.subr.mxu0 0.0
          %1261 = vmatpush1.xpose.msra.mxu0 0.0
          %1262 = vmatprep.subr.mxu0 0.0
          %1263 = vmatpush1.xpose.msra.mxu0 0.0
          %1264 = vmatprep.subr.mxu0 0.0
          %1265 = vmatpush1.xpose.msra.mxu0 0.0
          %1266 = vmatprep.subr.mxu0 0.0
          %1267 = vmatpush1.xpose.msra.mxu0 0.0
          %1268 = vmatprep.subr.mxu0 0.0
          %1269 = vmatpush1.xpose.msra.mxu0 0.0
          %1270 = vmatprep.subr.mxu0 0.0
          %1271 = vmatpush1.xpose.msra.mxu0 0.0
          %1272 = vmatprep.subr.mxu0 0.0
          %1273 = vmatpush1.xpose.msra.mxu0 0.0
          %1274 = vmatprep.subr.mxu0 0.0
          %1275 = vmatpush1.xpose.msra.mxu0 0.0
          %1276 = vmatprep.subr.mxu0 0.0
          %1277 = vmatpush1.xpose.msra.mxu0 0.0
          %1278 = vmatprep.subr.mxu0 0.0
          %1279 = vmatpush1.xpose.msra.mxu0 0.0
          %1280 = vmatprep.subr.mxu0 0.0
          %1281 = vmatpush1.xpose.msra.mxu0 0.0
          %1282 = vmatprep.subr.mxu0 0.0
          %1283 = vmatpush1.xpose.msra.mxu0 0.0
          %1284 = vmatprep.subr.mxu0 0.0
          %1285 = vmatpush1.xpose.msra.mxu0 0.0
          %1286 = vmatprep.subr.mxu0 0.0
          %1287 = vmatpush1.xpose.msra.mxu0 0.0
          %1288 = vmatprep.mubr.f32.mxu0 0.0
          %1289 = vmatmul.mubr.f32.gmra.mrb[0].mxu0 1.0
          %v1290 = vpop.f32.mrb[0].mxu0
          %v1291 = vadd.f32 0.0, %v1290
          %v1292 = vpop.f32.mrb[0].mxu0
          %1293 = vdwg.mxu0
          %v1294 = vlaneseq
          %v1295 = vshrl.u32 %v1294, 7
          %v1296 = vsub.s32 0, %v1295
          %v1297 = vrot.slane %v1291, %v1296
          %v1298 = vadd.f32 %v1193, %v1297
          %v1299 = vadd.f32 %v1195, %v1297
          %v1300 = vadd.f32 %v1197, %v1297
          %v1301 = vadd.f32 %v1199, %v1297
          %v1302 = vadd.f32 %v1201, %v1297
          %v1303 = vadd.f32 %v1203, %v1297
          %v1304 = vadd.f32 %v1205, %v1297
          %v1305 = vadd.f32 %v1207, %v1297
          %v1306 = vadd.f32 %v1209, %v1297
          %v1307 = vadd.f32 %v1211, %v1297
          %v1308 = vadd.f32 %v1213, %v1297
          %v1309 = vadd.f32 %v1215, %v1297
          %v1310 = vadd.f32 %v1217, %v1297
          %v1311 = vadd.f32 %v1219, %v1297
          %v1312 = vadd.f32 %v1221, %v1297
          %v1313 = vadd.f32 %v1223, %v1297
          %v1314 = vmul.f32 %v1114, 2.0
          %v1315 = vmul.f32 %v1119, 2.0
          %v1316 = vmul.f32 %v1124, 2.0
          %v1317 = vmul.f32 %v1129, 2.0
          %v1318 = vmul.f32 %v1134, 2.0
          %v1319 = vmul.f32 %v1139, 2.0
          %v1320 = vmul.f32 %v1144, 2.0
          %v1321 = vmul.f32 %v1149, 2.0
          %v1322 = vmul.f32 %v1154, 2.0
          %v1323 = vmul.f32 %v1159, 2.0
          %v1324 = vmul.f32 %v1164, 2.0
          %v1325 = vmul.f32 %v1169, 2.0
          %v1326 = vmul.f32 %v1174, 2.0
          %v1327 = vmul.f32 %v1179, 2.0
          %v1328 = vmul.f32 %v1184, 2.0
          %v1329 = vmul.f32 %v1189, 2.0
          %v1330 = vsub.f32 %v1298, %v1314
          %v1331 = vsub.f32 %v1299, %v1315
          %v1332 = vsub.f32 %v1300, %v1316
          %v1333 = vsub.f32 %v1301, %v1317
          %v1334 = vsub.f32 %v1302, %v1318
          %v1335 = vsub.f32 %v1303, %v1319
          %v1336 = vsub.f32 %v1304, %v1320
          %v1337 = vsub.f32 %v1305, %v1321
          %v1338 = vsub.f32 %v1306, %v1322
          %v1339 = vsub.f32 %v1307, %v1323
          %v1340 = vsub.f32 %v1308, %v1324
          %v1341 = vsub.f32 %v1309, %v1325
          %v1342 = vsub.f32 %v1310, %v1326
          %v1343 = vsub.f32 %v1311, %v1327
          %v1344 = vsub.f32 %v1312, %v1328
          %v1345 = vsub.f32 %v1313, %v1329
          %v1346 = vmax.f32 %v1330, 0.0
          %v1347 = vmax.f32 %v1331, 0.0
          %v1348 = vmax.f32 %v1332, 0.0
          %v1349 = vmax.f32 %v1333, 0.0
          %v1350 = vmax.f32 %v1334, 0.0
          %v1351 = vmax.f32 %v1335, 0.0
          %v1352 = vmax.f32 %v1336, 0.0
          %v1353 = vmax.f32 %v1337, 0.0
          %v1354 = vmax.f32 %v1338, 0.0
          %v1355 = vmax.f32 %v1339, 0.0
          %v1356 = vmax.f32 %v1340, 0.0
          %v1357 = vmax.f32 %v1341, 0.0
          %v1358 = vmax.f32 %v1342, 0.0
          %v1359 = vmax.f32 %v1343, 0.0
          %v1360 = vmax.f32 %v1344, 0.0
          %v1361 = vmax.f32 %v1345, 0.0
          %1362 = vst [vmem:[%s346] sm:$0xff] %v1346
          %1363 = vst [vmem:[%s346 + $0x8] sm:$0xff] %v1347
          %1364 = vst [vmem:[%s346 + $0x10] sm:$0xff] %v1348
          %1365 = vst [vmem:[%s346 + $0x18] sm:$0xff] %v1349
          %1366 = vst [vmem:[%s346 + $0x20] sm:$0xff] %v1350
          %1367 = vst [vmem:[%s346 + $0x28] sm:$0xff] %v1351
          %1368 = vst [vmem:[%s346 + $0x30] sm:$0xff] %v1352
          %1369 = vst [vmem:[%s346 + $0x38] sm:$0xff] %v1353
          %1370 = vst [vmem:[%s346 + $0x40] sm:$0xff] %v1354
          %1371 = vst [vmem:[%s346 + $0x48] sm:$0xff] %v1355
          %1372 = vst [vmem:[%s346 + $0x50] sm:$0xff] %v1356
          %1373 = vst [vmem:[%s346 + $0x58] sm:$0xff] %v1357
          %1374 = vst [vmem:[%s346 + $0x60] sm:$0xff] %v1358
          %1375 = vst [vmem:[%s346 + $0x68] sm:$0xff] %v1359
          %1376 = vst [vmem:[%s346 + $0x70] sm:$0xff] %v1360
          %1377 = vst [vmem:[%s346 + $0x78] sm:$0xff] %v1361
        $region56: #{tpu_custom_call.1} parent=39 // pred_fallthru
          _
        %s1378 = sand.u32 %s164, 1
        %s1379 = scalar_lea.sflag [#allocation5], %s1378
        %s1380 = sand.u32 %s164, 1
        %s1381 = smul.addr %s1380, 64
        %s1382 = scalar_lea.vmem [#allocation9], %s1381
        %s1383 = sand.u32 %s27, 1
        %s1384 = scalar_lea.sflag [#allocation11], %s1383
        %s1385 = sand.u32 %s190, 1
        %s1386 = smul.addr %s1385, 128
        %s1387 = scalar_lea.vmem [#allocation10], %s1386
        %s1388 = sand.u32 %s27, 1
        %s1389 = scalar_lea.sflag [#allocation11], %s1388
        %s1390 = sand.u32 %s216, 1
        %s1391 = smul.addr %s1390, 64
        %s1392 = scalar_lea.vmem [#allocation12], %s1391
        // Predicated region
        $region57: #{tpu_custom_call.1} parent=39 // pred_check
          %p1393 = pneg %p174
        $region58: #{tpu_custom_call.1} parent=39 // pred_check_branch
          %1395 = sbr.rel (%p1393) target = $region60
        $region59: #{tpu_custom_call.1} parent=39 // pred_region
          %s1397 = ssub.s32 1024, 1024
          %1398 = vsyncadd %s1379, %s1397
          %s1399 = smul.addr %s31, 16
          %s1400 = smul.addr %s1399, 64
          %s1401 = scalar_lea.hbm %s5, %s1400
          %s1402 = sshll.u32 %s1382, 4
          %s1403 = int_to_ptr.vmem [resolvable:$true] %s1402
          %1408 = dma.vmem_to_hbm [thread:$0]  %s1403, 1024, %s1401, %s1379, 64, 64, 4
        $region60: #{tpu_custom_call.1} parent=39 // pred_fallthru
          _
        // Predicated region
        $region61: #{tpu_custom_call.1} parent=39 // pred_check
          %p1409 = pneg %p200
        $region62: #{tpu_custom_call.1} parent=39 // pred_check_branch
          %1411 = sbr.rel (%p1409) target = $region64
        $region63: #{tpu_custom_call.1} parent=39 // pred_region
          %s1413 = ssub.s32 2048, 2048
          %1414 = vsyncadd %s1384, %s1413
          %s1415 = smul.addr %s31, 16
          %s1416 = smul.addr %s1415, 128
          %s1417 = scalar_lea.hbm %s6, %s1416
          %s1418 = sshll.u32 %s1387, 4
          %s1419 = int_to_ptr.vmem [resolvable:$true] %s1418
          %1424 = dma.vmem_to_hbm [thread:$0]  %s1419, 2048, %s1417, %s1384, 128, 128, 8
        $region64: #{tpu_custom_call.1} parent=39 // pred_fallthru
          _
        // Predicated region
        $region65: #{tpu_custom_call.1} parent=39 // pred_check
          %p1425 = pneg %p226
        $region66: #{tpu_custom_call.1} parent=39 // pred_check_branch
          %1427 = sbr.rel (%p1425) target = $region68
        $region67: #{tpu_custom_call.1} parent=39 // pred_region
          %s1429 = ssub.s32 1024, 1024
          %1430 = vsyncadd %s1389, %s1429
          %s1431 = smul.addr %s31, 16
          %s1432 = smul.addr %s1431, 64
          %s1433 = scalar_lea.hbm %s7, %s1432
          %s1434 = sshll.u32 %s1392, 4
          %s1435 = int_to_ptr.vmem [resolvable:$true] %s1434
          %1440 = dma.vmem_to_hbm [thread:$0]  %s1435, 1024, %s1433, %s1389, 64, 64, 4
        $region68: #{tpu_custom_call.1} parent=39 // pred_fallthru
          _
      $region40: #{tpu_custom_call.1} parent=5 // pred_fallthru
        _
      %p1441 = scmp.le.s32.totalorder 2, %s22
      // Predicated region
      $region69: #{tpu_custom_call.1} parent=5 // pred_check
        %p1442 = pneg %p1441
      $region70: #{tpu_custom_call.1} parent=5 // pred_check_branch
        %1444 = sbr.rel (%p1442) target = $region72
      $region71: #{tpu_custom_call.1} parent=5 // pred_region
        %s1445 = ssub.s32 %s22, 2
        // Predicated region
        $region73: #{tpu_custom_call.1} parent=71 // pred_check
          %p1446 = pneg %p180
        $region74: #{tpu_custom_call.1} parent=71 // pred_check_branch
          %1448 = sbr.rel (%p1446) target = $region76
        $region75: #{tpu_custom_call.1} parent=71 // pred_region
          %s1449 = sand.u32 %s165, 1
          %s1450 = scalar_lea.sflag [#allocation5], %s1449
          %s1451 = sand.u32 %s165, 1
          %s1452 = smul.addr %s1451, 64
          %s1453 = scalar_lea.vmem [#allocation9], %s1452
          %1454 = dma.done %s1450, 1024
        $region76: #{tpu_custom_call.1} parent=71 // pred_fallthru
          _
        // Predicated region
        $region77: #{tpu_custom_call.1} parent=71 // pred_check
          %p1455 = pneg %p206
        $region78: #{tpu_custom_call.1} parent=71 // pred_check_branch
          %1457 = sbr.rel (%p1455) target = $region80
        $region79: #{tpu_custom_call.1} parent=71 // pred_region
          %s1458 = sand.u32 %s28, 1
          %s1459 = scalar_lea.sflag [#allocation11], %s1458
          %s1460 = sand.u32 %s191, 1
          %s1461 = smul.addr %s1460, 128
          %s1462 = scalar_lea.vmem [#allocation10], %s1461
          %1463 = dma.done %s1459, 2048
        $region80: #{tpu_custom_call.1} parent=71 // pred_fallthru
          _
        // Predicated region
        $region81: #{tpu_custom_call.1} parent=71 // pred_check
          %p1464 = pneg %p232
        $region82: #{tpu_custom_call.1} parent=71 // pred_check_branch
          %1466 = sbr.rel (%p1464) target = $region84
        $region83: #{tpu_custom_call.1} parent=71 // pred_region
          %s1467 = sand.u32 %s28, 1
          %s1468 = scalar_lea.sflag [#allocation11], %s1467
          %s1469 = sand.u32 %s217, 1
          %s1470 = smul.addr %s1469, 64
          %s1471 = scalar_lea.vmem [#allocation12], %s1470
          %1472 = dma.done %s1468, 1024
        $region84: #{tpu_custom_call.1} parent=71 // pred_fallthru
          _
      $region72: #{tpu_custom_call.1} parent=5 // pred_fallthru
        _
    $region6: #{tpu_custom_call.1} parent=1 // loop_footer
      %s26 = sadd.s32 1, %s22
    $region7: #{tpu_custom_call.1} parent=1 // loop_footer_branch
      %21 = sbr.rel target = $region3
    $region8: #{tpu_custom_call.1} parent=1 // loop_exit
      _
    %1473 = vsyncpa [#allocation5], 1
    %s1474 = scalar_lea.sflag [#allocation5], 1
    %1475 = vsyncpa %s1474, 1
    %1476 = vsyncpa [#allocation11], 1
    %s1477 = scalar_lea.sflag [#allocation11], 1
    %1478 = vsyncpa %s1477, 1
    %1479 = vsyncpa [#allocation6], 1
    %s1480 = scalar_lea.sflag [#allocation6], 1
    %1481 = vsyncpa %s1480, 1
    %1482 = vsyncpa [#allocation8], 1

</llo_original>
